<compile_context>
chip_gen: v5e
topology: v5e:2x2
jax: 0.10.0
libtpu: 0.0.40
codegen_flags: <defaults>
</compile_context>

<pallas_src>
import functools

import jax
import jax.numpy as jnp
import numpy as np
from jax.experimental import pallas as pl
from jax.experimental.pallas import tpu as pltpu

LANE = 128          # Cout (=48) is padded to a full lane width
GRID_STEPS = 2      # >= 2 keeps v7x's two TensorCores busy; cheap on v5e/v6e


def _round_up(v, m):
    return (v + m - 1) // m * m


def prepare_params(w1, b1, w2, b2, H, W):
    """One-time weight preprocessing (hoisted out of the per-forward path).

    Returns lane-padded, MXU-ready matrices:
      w1p : (round_up(K1*K1*Cin,128), 128) bf16   flipped conv_t2 taps, flattened
      w2p : (round_up(H*W*Cin,  128), 128) bf16   conv_t3 per-pixel cumulative-tap weights
      b1p, b2p : (1, 128) f32 biases
    """
    Cin, Cout, K1, _ = w1.shape
    K2 = w2.shape[2]
    S2 = 3
    Ho, Wo = H + K1 - 1, W + K1 - 1
    KC1, KC2 = K1 * K1 * Cin, H * W * Cin
    KC1P, KC2P = _round_up(KC1, LANE), _round_up(KC2, LANE)
    padc = LANE - Cout

    # conv_t2: flipped weights flattened to (K1*K1*Cin, Cout).
    w1f = jnp.transpose(w1, (2, 3, 0, 1))[::-1, ::-1].astype(jnp.float32)   # (K1,K1,Cin,Cout)
    w1flat = w1f.reshape(KC1, Cout)
    w1p = jnp.pad(w1flat, ((0, KC1P - KC1), (0, padc))).astype(jnp.bfloat16)

    # conv_t3 only enters the output through a (cropped) spatial mean, so its spatial sum
    # collapses to x_flat @ Weff with per-input-pixel cumulative tap weights:
    #   sum_{oh<Ho,ow<Wo} conv_t3(x)[oh,ow] = sum_{ih,iw} x[ih,iw,:] @ Wcum[cnt_h(ih),cnt_w(iw)]
    #   cnt_h(ih) = #{kh < K2 : S2*ih + kh < Ho}   (analogously cnt_w).
    w2_hw = jnp.transpose(w2, (2, 3, 0, 1)).astype(jnp.float32)             # (K2,K2,Cin,Cout)
    wcum = jnp.cumsum(jnp.cumsum(w2_hw, axis=0), axis=1)
    wcum = jnp.pad(wcum, ((1, 0), (1, 0), (0, 0), (0, 0)))                  # wcum[a,b]=sum_{kh<a,kw<b}
    cnt_h = np.clip(Ho - S2 * np.arange(H), 0, K2)
    cnt_w = np.clip(Wo - S2 * np.arange(W), 0, K2)
    weff = wcum[cnt_h[:, None], cnt_w[None, :]]                             # (H,W,Cin,Cout)
    w2flat = weff.reshape(KC2, Cout)
    w2p = jnp.pad(w2flat, ((0, KC2P - KC2), (0, padc))).astype(jnp.bfloat16)

    b1p = jnp.pad(b1.reshape(1, Cout).astype(jnp.float32), ((0, 0), (0, padc)))
    b2p = jnp.pad(b2.reshape(1, Cout).astype(jnp.float32), ((0, 0), (0, padc)))
    return w1p, w2p, b1p, b2p


def _fused_kernel(lhs_ref, x2_ref, w1_ref, w2_ref, b1_ref, b2_ref, out_ref, *, G, M, inv):
    # conv_t2 for G whole images as ONE MXU contraction (bf16 operands, f32 accumulation).
    f1 = jnp.dot(lhs_ref[...], w1_ref[...],
                 preferred_element_type=jnp.float32) + b1_ref[...]          # (G*M, LANE)
    f4 = jnp.where(f1 > 0, f1, f1 * -0.132)
    if G == 1:
        sum4 = jnp.sum(f4, axis=0, keepdims=True)                           # (1, LANE)
    else:
        sum4 = jnp.sum(f4.reshape(G, M, LANE), axis=1)                      # (G, LANE)
    # cropped conv_t3 spatial sum for the same G images (bias handled below: mean(b2)==b2).
    s2 = jnp.dot(x2_ref[...], w2_ref[...],
                 preferred_element_type=jnp.float32)                        # (G, LANE)
    out_ref[...] = (sum4 + s2) * inv + b2_ref[...]


@functools.partial(jax.jit, static_argnames=("k1", "cout"))
def model_forward(x_nchw, w1p, w2p, b1p, b2p, *, k1=5, cout=48):
    """x_nchw: (N, Cin, H, W) f32; w*p/b*p produced once by prepare_params."""
    N, Cin, H, W = x_nchw.shape
    Ho, Wo = H + k1 - 1, W + k1 - 1
    M = Ho * Wo
    KC1, KC2 = k1 * k1 * Cin, H * W * Cin
    KC1P, KC2P = w1p.shape[0], w2p.shape[0]
    inv = 1.0 / float(M)

    steps = min(N, GRID_STEPS)           # 2 parallel steps (one per v7x TensorCore)
    G = -(-N // steps)                   # images folded into the M dim per grid step
    Np = steps * G

    x_nhwc = jnp.transpose(x_nchw, (0, 2, 3, 1)).astype(jnp.float32)        # (N,H,W,Cin)
    if Np > N:
        x_nhwc = jnp.pad(x_nhwc, ((0, Np - N), (0, 0), (0, 0), (0, 0)))

    # im2col LHS for conv_t2 (pure layout plumbing; built inside the same jit so XLA fuses
    # pad + slices + concat into one copy).  NOTE: if H/W/N grow substantially, move this
    # gather in-kernel (DMA the padded image and build the tile in VMEM scratch) to avoid
    # the ~K1*K1x HBM inflation and re-derive tiles against v7x's 64 MiB VMEM.
    xp = jnp.pad(x_nhwc, ((0, 0), (k1 - 1, k1 - 1), (k1 - 1, k1 - 1), (0, 0)))
    cols = [xp[:, a:a + Ho, b:b + Wo, :] for a in range(k1) for b in range(k1)]
    lhs1 = jnp.concatenate(cols, axis=-1).reshape(Np, M, KC1)
    lhs1 = jnp.pad(lhs1, ((0, 0), (0, 0), (0, KC1P - KC1)))
    lhs1 = lhs1.reshape(steps, G * M, KC1P).astype(jnp.bfloat16)

    # Flattened raw x for the conv_t3 weighted reduction (same (ih, iw, ci) order as Weff).
    x2 = x_nhwc.reshape(Np, KC2)
    x2 = jnp.pad(x2, ((0, 0), (0, KC2P - KC2)))
    x2 = x2.reshape(steps, G, KC2P).astype(jnp.bfloat16)

    kernel = functools.partial(_fused_kernel, G=G, M=M, inv=inv)
    grid_spec = pltpu.PrefetchScalarGridSpec(
        num_scalar_prefetch=0,
        grid=(steps,),
        in_specs=[
            pl.BlockSpec((None, G * M, KC1P), lambda s: (s, 0, 0)),   # im2col LHS, per step
            pl.BlockSpec((None, G, KC2P), lambda s: (s, 0, 0)),       # raw x, per step
            pl.BlockSpec((KC1P, LANE), lambda s: (0, 0)),             # conv_t2 weights (invariant)
            pl.BlockSpec((KC2P, LANE), lambda s: (0, 0)),             # conv_t3 eff. weights
            pl.BlockSpec((1, LANE), lambda s: (0, 0)),                # b1
            pl.BlockSpec((1, LANE), lambda s: (0, 0)),                # b2
        ],
        out_specs=pl.BlockSpec((None, G, LANE), lambda s: (s, 0, 0)),
    )
    out = pl.pallas_call(
        kernel,
        out_shape=jax.ShapeDtypeStruct((steps, G, LANE), jnp.float32),
        grid_spec=grid_spec,
        compiler_params=pltpu.CompilerParams(dimension_semantics=("parallel",)),
    )(lhs1, x2, w1p, w2p, b1p, b2p)

    return out.reshape(Np, LANE)[:N, :cout].reshape(N, cout, 1, 1)   # PyTorch (N, C, 1, 1)


# ---------------- pure-JAX reference (for correctness check) ----------------
def _conv_transpose2d_ref(x, w, b, stride):
    N, Cin, H, W = x.shape
    Cout, k = w.shape[1], w.shape[2]
    Ho, Wo = (H - 1) * stride + k, (W - 1) * stride + k
    out = jnp.zeros((N, Cout, Ho, Wo), jnp.float32)
    for kh in range(k):
        for kw in range(k):
            contrib = jnp.einsum('nchw,cd->ndhw', x, w[:, :, kh, kw],
                                 precision=jax.lax.Precision.HIGHEST)
            out = out.at[:, :, kh:kh + (H - 1) * stride + 1:stride,
                               kw:kw + (W - 1) * stride + 1:stride].add(contrib)
    return out + b[None, :, None, None]


def reference_forward(x, w1, b1, w2, b2):
    f1 = _conv_transpose2d_ref(x, w1, b1, 1)
    f4 = jnp.where(f1 > 0, f1, f1 * -0.132)
    f2 = _conv_transpose2d_ref(x, w2, b2, 3)
    # TODO(synk): same crop as the kernel path (original add is ill-shaped in PyTorch).
    f5 = f4 + f2[:, :, :f1.shape[2], :f1.shape[3]]
    return jnp.mean(f5, axis=(2, 3), keepdims=True)


if __name__ == "__main__":
    key = jax.random.PRNGKey(0)
    kx, kw1, kb1, kw2, kb2 = jax.random.split(key, 5)

    N, Cin, H, W, Cout = 2, 35, 8, 8, 48       # small shapes consistent with the module
    x = jax.random.normal(kx, (N, Cin, H, W), jnp.float32)
    w1 = jax.random.normal(kw1, (Cin, Cout, 5, 5), jnp.float32) * 0.05
    b1 = jax.random.normal(kb1, (Cout,), jnp.float32) * 0.05
    w2 = jax.random.normal(kw2, (Cin, Cout, 6, 6), jnp.float32) * 0.05
    b2 = jax.random.normal(kb2, (Cout,), jnp.float32) * 0.05

    # One-time weight preprocessing, outside the per-call path.
    params = prepare_params(w1, b1, w2, b2, H, W)
    params = jax.block_until_ready(params)
    w1p, w2p, b1p, b2p = params

    out = jax.block_until_ready(model_forward(x, w1p, w2p, b1p, b2p, k1=5, cout=Cout))
    assert out.shape == (N, Cout, 1, 1)

    ref = jax.block_until_ready(reference_forward(x, w1, b1, w2, b2))
    # Tolerance reflects bf16-operand MXU numerics (default precision per the perf review);
    # the f32 HIGHEST reference differs by ~1e-3 worst-case at these contraction lengths.
    np.testing.assert_allclose(np.asarray(out), np.asarray(ref), atol=5e-3, rtol=5e-3)

    print("KERNEL_OK")
</pallas_src>

<mosaic_0001>
module attributes {stable_mosaic.version = 11 : i64} {
  func.func @_fused_kernel(%arg0: i32, %arg1: memref<1x144x896xbf16, #tpu.memory_space<vmem>>, %arg2: memref<1x1x2304xbf16, #tpu.memory_space<vmem>>, %arg3: memref<896x128xbf16, #tpu.memory_space<vmem>>, %arg4: memref<2304x128xbf16, #tpu.memory_space<vmem>>, %arg5: memref<1x128xf32, #tpu.memory_space<vmem>>, %arg6: memref<1x128xf32, #tpu.memory_space<vmem>>, %arg7: memref<1x1x128xf32, #tpu.memory_space<vmem>>) attributes {dimension_semantics = [#tpu.dimension_semantics<parallel>], iteration_bounds = array<i64: 2>, scalar_prefetch = 0 : i64, scratch_operands = 0 : i64, tpu.core_type = #tpu.core_type<tc>, window_params = [{transform_indices = @transform_0, window_bounds = array<i64: 1, 144, 896>}, {transform_indices = @transform_1, window_bounds = array<i64: 1, 1, 2304>}, {pipeline_mode = #tpu.pipeline_mode<synchronous>, transform_indices = @transform_2, window_bounds = array<i64: 896, 128>}, {pipeline_mode = #tpu.pipeline_mode<synchronous>, transform_indices = @transform_3, window_bounds = array<i64: 2304, 128>}, {pipeline_mode = #tpu.pipeline_mode<synchronous>, transform_indices = @transform_4, window_bounds = array<i64: 1, 128>}, {pipeline_mode = #tpu.pipeline_mode<synchronous>, transform_indices = @transform_5, window_bounds = array<i64: 1, 128>}, {transform_indices = @transform_6, window_bounds = array<i64: 1, 1, 128>}]} {
    %c0 = arith.constant 0 : index
    %c0_0 = arith.constant 0 : index
    %c0_1 = arith.constant 0 : index
    %0 = vector.load %arg1[%c0, %c0_0, %c0_1] : memref<1x144x896xbf16, #tpu.memory_space<vmem>>, vector<1x144x896xbf16>
    %1 = vector.shape_cast %0 : vector<1x144x896xbf16> to vector<144x896xbf16>
    %c0_2 = arith.constant 0 : index
    %c0_3 = arith.constant 0 : index
    %2 = vector.load %arg3[%c0_2, %c0_3] : memref<896x128xbf16, #tpu.memory_space<vmem>>, vector<896x128xbf16>
    %cst = arith.constant dense<0.000000e+00> : vector<144x128xf32>
    %3 = tpu.matmul %1, %2, %cst {dimension_numbers = #tpu.dot_dimension_numbers<[1], [0], [0], [1], [0, 0, 1, 1], [], []>} : vector<144x896xbf16>, vector<896x128xbf16>, vector<144x128xf32> -> vector<144x128xf32>
    %c0_4 = arith.constant 0 : index
    %c0_5 = arith.constant 0 : index
    %4 = vector.load %arg5[%c0_4, %c0_5] : memref<1x128xf32, #tpu.memory_space<vmem>>, vector<1x128xf32>
    %5 = vector.broadcast %4 : vector<1x128xf32> to vector<144x128xf32>
    %6 = arith.addf %3, %5 : vector<144x128xf32>
    %cst_6 = arith.constant 0.000000e+00 : f32
    %7 = vector.broadcast %cst_6 : f32 to vector<144x128xf32>
    %8 = arith.cmpf ogt, %6, %7 : vector<144x128xf32>
    %cst_7 = arith.constant -1.320000e-01 : f32
    %9 = vector.broadcast %cst_7 : f32 to vector<144x128xf32>
    %10 = arith.mulf %6, %9 : vector<144x128xf32>
    %11 = arith.select %8, %6, %10 : vector<144x128xi1>, vector<144x128xf32>
    %cst_8 = arith.constant dense<0.000000e+00> : vector<128xf32>
    %12 = vector.multi_reduction <add>, %11, %cst_8 [0] : vector<144x128xf32> to vector<128xf32>
    %13 = vector.shape_cast %12 : vector<128xf32> to vector<1x128xf32>
    %c0_9 = arith.constant 0 : index
    %c0_10 = arith.constant 0 : index
    %c0_11 = arith.constant 0 : index
    %14 = vector.load %arg2[%c0_9, %c0_10, %c0_11] : memref<1x1x2304xbf16, #tpu.memory_space<vmem>>, vector<1x1x2304xbf16>
    %15 = vector.shape_cast %14 : vector<1x1x2304xbf16> to vector<1x2304xbf16>
    %c0_12 = arith.constant 0 : index
    %c0_13 = arith.constant 0 : index
    %16 = vector.load %arg4[%c0_12, %c0_13] : memref<2304x128xbf16, #tpu.memory_space<vmem>>, vector<2304x128xbf16>
    %cst_14 = arith.constant dense<0.000000e+00> : vector<1x128xf32>
    %17 = tpu.matmul %15, %16, %cst_14 {dimension_numbers = #tpu.dot_dimension_numbers<[1], [0], [0], [1], [0, 0, 1, 1], [], []>} : vector<1x2304xbf16>, vector<2304x128xbf16>, vector<1x128xf32> -> vector<1x128xf32>
    %18 = arith.addf %13, %17 : vector<1x128xf32>
    %cst_15 = arith.constant 0.0069444445 : f32
    %19 = vector.broadcast %cst_15 : f32 to vector<1x128xf32>
    %20 = arith.mulf %18, %19 : vector<1x128xf32>
    %c0_16 = arith.constant 0 : index
    %c0_17 = arith.constant 0 : index
    %21 = vector.load %arg6[%c0_16, %c0_17] : memref<1x128xf32, #tpu.memory_space<vmem>>, vector<1x128xf32>
    %22 = arith.addf %20, %21 : vector<1x128xf32>
    %c0_18 = arith.constant 0 : index
    %c0_19 = arith.constant 0 : index
    %c0_20 = arith.constant 0 : index
    %23 = vector.load %arg7[%c0_18, %c0_19, %c0_20] : memref<1x1x128xf32, #tpu.memory_space<vmem>>, vector<1x1x128xf32>
    %24 = vector.shape_cast %23 : vector<1x1x128xf32> to vector<1x128xf32>
    %25 = vector.shape_cast %22 : vector<1x128xf32> to vector<1x1x128xf32>
    tpu.vector_store %arg7[%c0_18, %c0_19, %c0_20], %25 {strides = array<i32>} : memref<1x1x128xf32, #tpu.memory_space<vmem>>, vector<1x1x128xf32>,
    return
  }
  func.func @transform_0(%arg0: i32) -> (i32, i32, i32) {
    %c0_i32 = arith.constant 0 : i32
    %c0_i32_0 = arith.constant 0 : i32
    %c0_i32_1 = arith.constant 0 : i32
    return %arg0, %c0_i32, %c0_i32_0 : i32, i32, i32
  }
  func.func @transform_1(%arg0: i32) -> (i32, i32, i32) {
    %c0_i32 = arith.constant 0 : i32
    %c0_i32_0 = arith.constant 0 : i32
    %c0_i32_1 = arith.constant 0 : i32
    return %arg0, %c0_i32, %c0_i32_0 : i32, i32, i32
  }
  func.func @transform_2(%arg0: i32) -> (i32, i32) {
    %c0_i32 = arith.constant 0 : i32
    %c0_i32_0 = arith.constant 0 : i32
    %c0_i32_1 = arith.constant 0 : i32
    return %c0_i32, %c0_i32_0 : i32, i32
  }
  func.func @transform_3(%arg0: i32) -> (i32, i32) {
    %c0_i32 = arith.constant 0 : i32
    %c0_i32_0 = arith.constant 0 : i32
    %c0_i32_1 = arith.constant 0 : i32
    return %c0_i32, %c0_i32_0 : i32, i32
  }
  func.func @transform_4(%arg0: i32) -> (i32, i32) {
    %c0_i32 = arith.constant 0 : i32
    %c0_i32_0 = arith.constant 0 : i32
    %c0_i32_1 = arith.constant 0 : i32
    return %c0_i32, %c0_i32_0 : i32, i32
  }
  func.func @transform_5(%arg0: i32) -> (i32, i32) {
    %c0_i32 = arith.constant 0 : i32
    %c0_i32_0 = arith.constant 0 : i32
    %c0_i32_1 = arith.constant 0 : i32
    return %c0_i32, %c0_i32_0 : i32, i32
  }
  func.func @transform_6(%arg0: i32) -> (i32, i32, i32) {
    %c0_i32 = arith.constant 0 : i32
    %c0_i32_0 = arith.constant 0 : i32
    %c0_i32_1 = arith.constant 0 : i32
    return %arg0, %c0_i32, %c0_i32_0 : i32, i32, i32
  }
}

</mosaic_0001>

<llo_original>
// kernel: model_forward.1
$region0: #{model_forward.1}
  #allocation0 [shape = 'u32[]', space=smem, size = 0x4, offset = 0x4, fixed_abs, tag = 'smem constant byte address 0x4 - core index']
  #allocation1 [shape = 'u32[72,128]{1,0:T(1,128)}', space=vmem, size = 0x9000, scoped, tag = 'internal scratch']
  %s0 = inlined_call_operand.vmem [shape: bf16[2,144,896], index: 0, kind: input, shape index: {}]
  %s1 = inlined_call_operand.vmem [shape: bf16[2,1,2304], index: 1, kind: input, shape index: {}]
  %s2 = inlined_call_operand.vmem [shape: bf16[896,128], index: 2, kind: input, shape index: {}]
  %s3 = inlined_call_operand.vmem [shape: bf16[2304,128], index: 3, kind: input, shape index: {}]
  %s4 = inlined_call_operand.vmem [shape: f32[1,128], index: 4, kind: input, shape index: {}]
  %s5 = inlined_call_operand.vmem [shape: f32[1,128], index: 5, kind: input, shape index: {}]
  %s6 = inlined_call_operand.hbm [shape: f32[2,1,128], index: 6, kind: output, shape index: {}]
  %s7 = sld [smem:[#allocation0]]
  $region57: #{model_forward.1} parent=0
    _
  %s9 = ssub.s32 1, %s7
  %s10 = scalar_select 0, %s9, %s7
  $region1: #{model_forward.1} parent=0
    #allocation2 [shape = 'u8[1024]{0}', space=vmem, size = 0x400, scoped, tag = 'output window, operand 0']
    #allocation3 [shape = 's32[2]{0}', space=sflag, size = 0x8, scoped, tag = 'scoped memory for model_forward.1']
    %11 = vsyncpa [#allocation3], 0
    %s12 = scalar_lea.sflag [#allocation3], 1
    %13 = vsyncpa %s12, 0
    loop: start=0, step=1, limit=4
    $region2: #{model_forward.1} parent=1 // loop_pre_header
      _
    $region3: #{model_forward.1} parent=1 // loop_header
      %s15 = sphi 0, %s19
      %p16 = scmp.ge.s32.totalorder %s15, 4
      %s25 = sphi 0, %s27
      %s28 = sphi 0, %s25
      %s29 = sphi 0, %s28
      %s45 = sphi 0, %s29
      %s51 = sphi 0, %s53
      %s54 = sphi 0, %s51
      %s55 = sphi 0, %s54
      %s71 = sphi 0, %s55
      %s75 = sphi 0, %s75
      %s77 = sphi 0, %s75
      %s78 = sphi 0, %s77
      %s92 = sphi 0, %s78
      %s96 = sphi 0, %s96
      %s98 = sphi 0, %s96
      %s99 = sphi 0, %s98
      %s113 = sphi 0, %s99
      %s117 = sphi 0, %s117
      %s119 = sphi 0, %s117
      %s120 = sphi 0, %s119
      %s134 = sphi 0, %s120
      %s138 = sphi 0, %s138
      %s140 = sphi 0, %s138
      %s141 = sphi 0, %s140
      %s155 = sphi 0, %s141
      %s161 = sphi 0, %s163
      %s164 = sphi 0, %s161
      %s165 = sphi 0, %s164
      %s181 = sphi 0, %s165
    $region4: #{model_forward.1} parent=1 // loop_header_branch
      %18 = sbr.rel (%p16) target = $region8
    $region5: #{model_forward.1} parent=1 // loop_body
      %s20 = ssub.s32 %s15, 1
      %s21 = ssub.s32 %s15, 2
      %s22 = sadd.s32 %s15, 1
      %s23 = ssub.s32 %s15, %s22
      %p24 = scmp.eq.s32.totalorder %s23, 0
      %s26 = sadd.s32 %s25, 1
      %s27 = scalar_select %p24, %s25, %s26
      %p30 = pneg %p24
      %p31 = scmp.eq.s32.totalorder %s15, 1
      %p32 = por %p30, %p31
      %p33 = scmp.ne.s32.totalorder %s25, %s28
      %p34 = scmp.eq.s32.totalorder %s15, 0
      %p35 = por %p33, %p34
      %p36 = scmp.ne.s32.totalorder %s25, %s28
      %p37 = scmp.eq.s32.totalorder %s20, 1
      %p38 = por %p36, %p37
      %p39 = scmp.ne.s32.totalorder %s28, %s29
      %p40 = scmp.eq.s32.totalorder %s20, 0
      %p41 = por %p39, %p40
      %p42 = scmp.ne.s32.totalorder %s28, %s29
      %p43 = scmp.eq.s32.totalorder %s21, 1
      %p44 = por %p42, %p43
      %p46 = scmp.ne.s32.totalorder %s29, %s45
      %p47 = scmp.eq.s32.totalorder %s21, 0
      %p48 = por %p46, %p47
      %s49 = ssub.s32 %s15, %s22
      %p50 = scmp.eq.s32.totalorder %s49, 0
      %s52 = sadd.s32 %s51, 1
      %s53 = scalar_select %p50, %s51, %s52
      %p56 = pneg %p50
      %p57 = scmp.eq.s32.totalorder %s15, 1
      %p58 = por %p56, %p57
      %p59 = scmp.ne.s32.totalorder %s51, %s54
      %p60 = scmp.eq.s32.totalorder %s15, 0
      %p61 = por %p59, %p60
      %p62 = scmp.ne.s32.totalorder %s51, %s54
      %p63 = scmp.eq.s32.totalorder %s20, 1
      %p64 = por %p62, %p63
      %p65 = scmp.ne.s32.totalorder %s54, %s55
      %p66 = scmp.eq.s32.totalorder %s20, 0
      %p67 = por %p65, %p66
      %p68 = scmp.ne.s32.totalorder %s54, %s55
      %p69 = scmp.eq.s32.totalorder %s21, 1
      %p70 = por %p68, %p69
      %p72 = scmp.ne.s32.totalorder %s55, %s71
      %p73 = scmp.eq.s32.totalorder %s21, 0
      %p74 = por %p72, %p73
      %s76 = sadd.s32 %s75, 1
      %p79 = scmp.eq.s32.totalorder %s15, 1
      %p80 = scmp.ne.s32.totalorder %s75, %s77
      %p81 = scmp.eq.s32.totalorder %s15, 0
      %p82 = por %p80, %p81
      %p83 = scmp.ne.s32.totalorder %s75, %s77
      %p84 = scmp.eq.s32.totalorder %s20, 1
      %p85 = por %p83, %p84
      %p86 = scmp.ne.s32.totalorder %s77, %s78
      %p87 = scmp.eq.s32.totalorder %s20, 0
      %p88 = por %p86, %p87
      %p89 = scmp.ne.s32.totalorder %s77, %s78
      %p90 = scmp.eq.s32.totalorder %s21, 1
      %p91 = por %p89, %p90
      %p93 = scmp.ne.s32.totalorder %s78, %s92
      %p94 = scmp.eq.s32.totalorder %s21, 0
      %p95 = por %p93, %p94
      %s97 = sadd.s32 %s96, 1
      %p100 = scmp.eq.s32.totalorder %s15, 1
      %p101 = scmp.ne.s32.totalorder %s96, %s98
      %p102 = scmp.eq.s32.totalorder %s15, 0
      %p103 = por %p101, %p102
      %p104 = scmp.ne.s32.totalorder %s96, %s98
      %p105 = scmp.eq.s32.totalorder %s20, 1
      %p106 = por %p104, %p105
      %p107 = scmp.ne.s32.totalorder %s98, %s99
      %p108 = scmp.eq.s32.totalorder %s20, 0
      %p109 = por %p107, %p108
      %p110 = scmp.ne.s32.totalorder %s98, %s99
      %p111 = scmp.eq.s32.totalorder %s21, 1
      %p112 = por %p110, %p111
      %p114 = scmp.ne.s32.totalorder %s99, %s113
      %p115 = scmp.eq.s32.totalorder %s21, 0
      %p116 = por %p114, %p115
      %s118 = sadd.s32 %s117, 1
      %p121 = scmp.eq.s32.totalorder %s15, 1
      %p122 = scmp.ne.s32.totalorder %s117, %s119
      %p123 = scmp.eq.s32.totalorder %s15, 0
      %p124 = por %p122, %p123
      %p125 = scmp.ne.s32.totalorder %s117, %s119
      %p126 = scmp.eq.s32.totalorder %s20, 1
      %p127 = por %p125, %p126
      %p128 = scmp.ne.s32.totalorder %s119, %s120
      %p129 = scmp.eq.s32.totalorder %s20, 0
      %p130 = por %p128, %p129
      %p131 = scmp.ne.s32.totalorder %s119, %s120
      %p132 = scmp.eq.s32.totalorder %s21, 1
      %p133 = por %p131, %p132
      %p135 = scmp.ne.s32.totalorder %s120, %s134
      %p136 = scmp.eq.s32.totalorder %s21, 0
      %p137 = por %p135, %p136
      %s139 = sadd.s32 %s138, 1
      %p142 = scmp.eq.s32.totalorder %s15, 1
      %p143 = scmp.ne.s32.totalorder %s138, %s140
      %p144 = scmp.eq.s32.totalorder %s15, 0
      %p145 = por %p143, %p144
      %p146 = scmp.ne.s32.totalorder %s138, %s140
      %p147 = scmp.eq.s32.totalorder %s20, 1
      %p148 = por %p146, %p147
      %p149 = scmp.ne.s32.totalorder %s140, %s141
      %p150 = scmp.eq.s32.totalorder %s20, 0
      %p151 = por %p149, %p150
      %p152 = scmp.ne.s32.totalorder %s140, %s141
      %p153 = scmp.eq.s32.totalorder %s21, 1
      %p154 = por %p152, %p153
      %p156 = scmp.ne.s32.totalorder %s141, %s155
      %p157 = scmp.eq.s32.totalorder %s21, 0
      %p158 = por %p156, %p157
      %s159 = ssub.s32 %s15, %s22
      %p160 = scmp.eq.s32.totalorder %s159, 0
      %s162 = sadd.s32 %s161, 1
      %s163 = scalar_select %p160, %s161, %s162
      %p166 = pneg %p160
      %p167 = scmp.eq.s32.totalorder %s15, 1
      %p168 = por %p166, %p167
      %p169 = scmp.ne.s32.totalorder %s161, %s164
      %p170 = scmp.eq.s32.totalorder %s15, 0
      %p171 = por %p169, %p170
      %p172 = scmp.ne.s32.totalorder %s161, %s164
      %p173 = scmp.eq.s32.totalorder %s20, 1
      %p174 = por %p172, %p173
      %p175 = scmp.ne.s32.totalorder %s164, %s165
      %p176 = scmp.eq.s32.totalorder %s20, 0
      %p177 = por %p175, %p176
      %p178 = scmp.ne.s32.totalorder %s164, %s165
      %p179 = scmp.eq.s32.totalorder %s21, 1
      %p180 = por %p178, %p179
      %p182 = scmp.ne.s32.totalorder %s165, %s181
      %p183 = scmp.eq.s32.totalorder %s21, 0
      %p184 = por %p182, %p183
      %p185 = scmp.le.s32.totalorder 1, %s15
      %p186 = scmp.lt.s32.totalorder %s15, 3
      %p187 = pnand %p185, %p186
      %p188 = pneg %p187
      // Predicated region
      $region9: #{model_forward.1} parent=5 // pred_check
        _
      $region10: #{model_forward.1} parent=5 // pred_check_branch
        %190 = sbr.rel (%p187) target = $region12
      $region11: #{model_forward.1} parent=5 // pred_region
        %s191 = ssub.s32 %s15, 1
        // Predicated region
        $region13: #{model_forward.1} parent=11 // pred_check
          %p192 = pneg %p88
        $region14: #{model_forward.1} parent=11 // pred_check_branch
          %194 = sbr.rel (%p192) target = $region16
        $region15: #{model_forward.1} parent=11 // pred_region
          _
        $region16: #{model_forward.1} parent=11 // pred_fallthru
          _
        // Predicated region
        $region17: #{model_forward.1} parent=11 // pred_check
          %p195 = pneg %p109
        $region18: #{model_forward.1} parent=11 // pred_check_branch
          %197 = sbr.rel (%p195) target = $region20
        $region19: #{model_forward.1} parent=11 // pred_region
          _
        $region20: #{model_forward.1} parent=11 // pred_fallthru
          _
        // Predicated region
        $region21: #{model_forward.1} parent=11 // pred_check
          %p198 = pneg %p130
        $region22: #{model_forward.1} parent=11 // pred_check_branch
          %200 = sbr.rel (%p198) target = $region24
        $region23: #{model_forward.1} parent=11 // pred_region
          _
        $region24: #{model_forward.1} parent=11 // pred_fallthru
          _
        // Predicated region
        $region25: #{model_forward.1} parent=11 // pred_check
          %p201 = pneg %p151
        $region26: #{model_forward.1} parent=11 // pred_check_branch
          %203 = sbr.rel (%p201) target = $region28
        $region27: #{model_forward.1} parent=11 // pred_region
          _
        $region28: #{model_forward.1} parent=11 // pred_fallthru
          _
      $region12: #{model_forward.1} parent=5 // pred_fallthru
        _
      %p204 = scmp.lt.s32.totalorder %s15, 2
      // Predicated region
      $region29: #{model_forward.1} parent=5 // pred_check
        %p205 = pneg %p204
      $region30: #{model_forward.1} parent=5 // pred_check_branch
        %207 = sbr.rel (%p205) target = $region32
      $region31: #{model_forward.1} parent=5 // pred_region
        // Predicated region
        $region33: #{model_forward.1} parent=31 // pred_check
          %p208 = pneg %p35
        $region34: #{model_forward.1} parent=31 // pred_check_branch
          %210 = sbr.rel (%p208) target = $region36
        $region35: #{model_forward.1} parent=31 // pred_region
          %p211 = scmp.lt.s32.totalorder %s15, 1
          %s212 = scalar_select %p211, %s15, 1
          %s213 = smul.addr %s212, 126
          %s214 = smul.addr %s213, 4
          %s215 = scalar_lea.vmem %s0, %s214
        $region36: #{model_forward.1} parent=31 // pred_fallthru
          _
        // Predicated region
        $region37: #{model_forward.1} parent=31 // pred_check
          %p216 = pneg %p61
        $region38: #{model_forward.1} parent=31 // pred_check_branch
          %218 = sbr.rel (%p216) target = $region40
        $region39: #{model_forward.1} parent=31 // pred_region
          %p219 = scmp.lt.s32.totalorder %s15, 1
          %s220 = scalar_select %p219, %s15, 1
          %s221 = smul.addr %s220, 18
          %s222 = scalar_lea.vmem %s1, %s221
        $region40: #{model_forward.1} parent=31 // pred_fallthru
          _
      $region32: #{model_forward.1} parent=5 // pred_fallthru
        _
      %p223 = scmp.le.s32.totalorder 1, %s15
      %p224 = scmp.lt.s32.totalorder %s15, 3
      %p225 = pnand %p223, %p224
      %p226 = pneg %p225
      // Predicated region
      $region41: #{model_forward.1} parent=5 // pred_check
        _
      $region42: #{model_forward.1} parent=5 // pred_check_branch
        %228 = sbr.rel (%p225) target = $region44
      $region43: #{model_forward.1} parent=5 // pred_region
        %s229 = ssub.s32 %s15, 1
        %p230 = scmp.lt.s32.totalorder %s20, 1
        %s231 = scalar_select %p230, %s20, 1
        %s232 = smul.addr %s231, 126
        %s233 = smul.addr %s232, 4
        %s234 = scalar_lea.vmem %s0, %s233
        %p235 = pneg %p41
        %p236 = pneg %p38
        %p237 = scmp.lt.s32.totalorder %s20, 1
        %s238 = scalar_select %p237, %s20, 1
        %s239 = smul.addr %s238, 18
        %s240 = scalar_lea.vmem %s1, %s239
        %p241 = pneg %p67
        %p242 = pneg %p64
        %p243 = pneg %p88
        %p244 = pneg %p85
        %p245 = pneg %p109
        %p246 = pneg %p106
        %p247 = pneg %p130
        %p248 = pneg %p127
        %p249 = pneg %p151
        %p250 = pneg %p148
        %p251 = pneg %p177
        %p252 = pneg %p174
        %s253 = sand.u32 %s164, 1
        %s254 = scalar_lea.sflag [#allocation3], %s253
        %s255 = sand.u32 %s164, 1
        %s256 = scalar_lea.vmem [#allocation2], %s255
        %p257 = scmp.lt.s32.totalorder %s20, 1
        %s258 = scalar_select %p257, %s20, 1
        %s259 = smul.addr %s258, 126
        %s260 = smul.addr %s259, 4
        %s261 = scalar_lea.vmem %s0, %s260
        %p262 = scmp.lt.s32.totalorder %s20, 1
        %s263 = scalar_select %p262, %s20, 1
        %s264 = smul.addr %s263, 18
        %s265 = scalar_lea.vmem %s1, %s264
        %v266 = vld [vmem:[%s261] sm:$0xff]
        %v267 = vld [vmem:[%s261 + $0x8] sm:$0xff]
        %v268 = vld [vmem:[%s261 + $0x10] sm:$0xff]
        %v269 = vld [vmem:[%s261 + $0x18] sm:$0xf]
        %v270 = vld [vmem:[%s261 + $0x1c] sm:$0xff]
        %v271 = vld [vmem:[%s261 + $0x24] sm:$0xff]
        %v272 = vld [vmem:[%s261 + $0x2c] sm:$0xff]
        %v273 = vld [vmem:[%s261 + $0x34] sm:$0xf]
        %v274 = vld [vmem:[%s261 + $0x38] sm:$0xff]
        %v275 = vld [vmem:[%s261 + $0x40] sm:$0xff]
        %v276 = vld [vmem:[%s261 + $0x48] sm:$0xff]
        %v277 = vld [vmem:[%s261 + $0x50] sm:$0xf]
        %v278 = vld [vmem:[%s261 + $0x54] sm:$0xff]
        %v279 = vld [vmem:[%s261 + $0x5c] sm:$0xff]
        %v280 = vld [vmem:[%s261 + $0x64] sm:$0xff]
        %v281 = vld [vmem:[%s261 + $0x6c] sm:$0xf]
        %v282 = vld [vmem:[%s261 + $0x70] sm:$0xff]
        %v283 = vld [vmem:[%s261 + $0x78] sm:$0xff]
        %v284 = vld [vmem:[%s261 + $0x80] sm:$0xff]
        %v285 = vld [vmem:[%s261 + $0x88] sm:$0xf]
        %v286 = vld [vmem:[%s261 + $0x8c] sm:$0xff]
        %v287 = vld [vmem:[%s261 + $0x94] sm:$0xff]
        %v288 = vld [vmem:[%s261 + $0x9c] sm:$0xff]
        %v289 = vld [vmem:[%s261 + $0xa4] sm:$0xf]
        %v290 = vld [vmem:[%s261 + $0xa8] sm:$0xff]
        %v291 = vld [vmem:[%s261 + $0xb0] sm:$0xff]
        %v292 = vld [vmem:[%s261 + $0xb8] sm:$0xff]
        %v293 = vld [vmem:[%s261 + $0xc0] sm:$0xf]
        %v294 = vld [vmem:[%s261 + $0xc4] sm:$0xff]
        %v295 = vld [vmem:[%s261 + $0xcc] sm:$0xff]
        %v296 = vld [vmem:[%s261 + $0xd4] sm:$0xff]
        %v297 = vld [vmem:[%s261 + $0xdc] sm:$0xf]
        %v298 = vld [vmem:[%s261 + $0xe0] sm:$0xff]
        %v299 = vld [vmem:[%s261 + $0xe8] sm:$0xff]
        %v300 = vld [vmem:[%s261 + $0xf0] sm:$0xff]
        %v301 = vld [vmem:[%s261 + $0xf8] sm:$0xf]
        %v302 = vld [vmem:[%s261 + $0xfc] sm:$0xff]
        %v303 = vld [vmem:[%s261 + $0x104] sm:$0xff]
        %v304 = vld [vmem:[%s261 + $0x10c] sm:$0xff]
        %v305 = vld [vmem:[%s261 + $0x114] sm:$0xf]
        %v306 = vld [vmem:[%s261 + $0x118] sm:$0xff]
        %v307 = vld [vmem:[%s261 + $0x120] sm:$0xff]
        %v308 = vld [vmem:[%s261 + $0x128] sm:$0xff]
        %v309 = vld [vmem:[%s261 + $0x130] sm:$0xf]
        %v310 = vld [vmem:[%s261 + $0x134] sm:$0xff]
        %v311 = vld [vmem:[%s261 + $0x13c] sm:$0xff]
        %v312 = vld [vmem:[%s261 + $0x144] sm:$0xff]
        %v313 = vld [vmem:[%s261 + $0x14c] sm:$0xf]
        %v314 = vld [vmem:[%s261 + $0x150] sm:$0xff]
        %v315 = vld [vmem:[%s261 + $0x158] sm:$0xff]
        %v316 = vld [vmem:[%s261 + $0x160] sm:$0xff]
        %v317 = vld [vmem:[%s261 + $0x168] sm:$0xf]
        %v318 = vld [vmem:[%s261 + $0x16c] sm:$0xff]
        %v319 = vld [vmem:[%s261 + $0x174] sm:$0xff]
        %v320 = vld [vmem:[%s261 + $0x17c] sm:$0xff]
        %v321 = vld [vmem:[%s261 + $0x184] sm:$0xf]
        %v322 = vld [vmem:[%s261 + $0x188] sm:$0xff]
        %v323 = vld [vmem:[%s261 + $0x190] sm:$0xff]
        %v324 = vld [vmem:[%s261 + $0x198] sm:$0xff]
        %v325 = vld [vmem:[%s261 + $0x1a0] sm:$0xf]
        %v326 = vld [vmem:[%s261 + $0x1a4] sm:$0xff]
        %v327 = vld [vmem:[%s261 + $0x1ac] sm:$0xff]
        %v328 = vld [vmem:[%s261 + $0x1b4] sm:$0xff]
        %v329 = vld [vmem:[%s261 + $0x1bc] sm:$0xf]
        %v330 = vld [vmem:[%s261 + $0x1c0] sm:$0xff]
        %v331 = vld [vmem:[%s261 + $0x1c8] sm:$0xff]
        %v332 = vld [vmem:[%s261 + $0x1d0] sm:$0xff]
        %v333 = vld [vmem:[%s261 + $0x1d8] sm:$0xf]
        %v334 = vld [vmem:[%s261 + $0x1dc] sm:$0xff]
        %v335 = vld [vmem:[%s261 + $0x1e4] sm:$0xff]
        %v336 = vld [vmem:[%s261 + $0x1ec] sm:$0xff]
        %v337 = vld [vmem:[%s261 + $0x1f4] sm:$0xf]
        %v338 = vld [vmem:[%s2] sm:$0xf]
        %v339 = vld [vmem:[%s2 + $0x4] sm:$0xf]
        %v340 = vld [vmem:[%s2 + $0x8] sm:$0xf]
        %v341 = vld [vmem:[%s2 + $0xc] sm:$0xf]
        %v342 = vld [vmem:[%s2 + $0x10] sm:$0xf]
        %v343 = vld [vmem:[%s2 + $0x14] sm:$0xf]
        %v344 = vld [vmem:[%s2 + $0x18] sm:$0xf]
        %v345 = vld [vmem:[%s2 + $0x1c] sm:$0xf]
        %v346 = vld [vmem:[%s2 + $0x20] sm:$0xf]
        %v347 = vld [vmem:[%s2 + $0x24] sm:$0xf]
        %v348 = vld [vmem:[%s2 + $0x28] sm:$0xf]
        %v349 = vld [vmem:[%s2 + $0x2c] sm:$0xf]
        %v350 = vld [vmem:[%s2 + $0x30] sm:$0xf]
        %v351 = vld [vmem:[%s2 + $0x34] sm:$0xf]
        %v352 = vld [vmem:[%s2 + $0x38] sm:$0xf]
        %v353 = vld [vmem:[%s2 + $0x3c] sm:$0xf]
        %v354 = vld [vmem:[%s2 + $0x40] sm:$0xf]
        %v355 = vld [vmem:[%s2 + $0x44] sm:$0xf]
        %v356 = vld [vmem:[%s2 + $0x48] sm:$0xf]
        %v357 = vld [vmem:[%s2 + $0x4c] sm:$0xf]
        %v358 = vld [vmem:[%s2 + $0x50] sm:$0xf]
        %v359 = vld [vmem:[%s2 + $0x54] sm:$0xf]
        %v360 = vld [vmem:[%s2 + $0x58] sm:$0xf]
        %v361 = vld [vmem:[%s2 + $0x5c] sm:$0xf]
        %v362 = vld [vmem:[%s2 + $0x60] sm:$0xf]
        %v363 = vld [vmem:[%s2 + $0x64] sm:$0xf]
        %v364 = vld [vmem:[%s2 + $0x68] sm:$0xf]
        %v365 = vld [vmem:[%s2 + $0x6c] sm:$0xf]
        %v366 = vld [vmem:[%s2 + $0x70] sm:$0xf]
        %v367 = vld [vmem:[%s2 + $0x74] sm:$0xf]
        %v368 = vld [vmem:[%s2 + $0x78] sm:$0xf]
        %v369 = vld [vmem:[%s2 + $0x7c] sm:$0xf]
        %v370 = vld [vmem:[%s2 + $0x80] sm:$0xf]
        %v371 = vld [vmem:[%s2 + $0x84] sm:$0xf]
        %v372 = vld [vmem:[%s2 + $0x88] sm:$0xf]
        %v373 = vld [vmem:[%s2 + $0x8c] sm:$0xf]
        %v374 = vld [vmem:[%s2 + $0x90] sm:$0xf]
        %v375 = vld [vmem:[%s2 + $0x94] sm:$0xf]
        %v376 = vld [vmem:[%s2 + $0x98] sm:$0xf]
        %v377 = vld [vmem:[%s2 + $0x9c] sm:$0xf]
        %v378 = vld [vmem:[%s2 + $0xa0] sm:$0xf]
        %v379 = vld [vmem:[%s2 + $0xa4] sm:$0xf]
        %v380 = vld [vmem:[%s2 + $0xa8] sm:$0xf]
        %v381 = vld [vmem:[%s2 + $0xac] sm:$0xf]
        %v382 = vld [vmem:[%s2 + $0xb0] sm:$0xf]
        %v383 = vld [vmem:[%s2 + $0xb4] sm:$0xf]
        %v384 = vld [vmem:[%s2 + $0xb8] sm:$0xf]
        %v385 = vld [vmem:[%s2 + $0xbc] sm:$0xf]
        %v386 = vld [vmem:[%s2 + $0xc0] sm:$0xf]
        %v387 = vld [vmem:[%s2 + $0xc4] sm:$0xf]
        %v388 = vld [vmem:[%s2 + $0xc8] sm:$0xf]
        %v389 = vld [vmem:[%s2 + $0xcc] sm:$0xf]
        %v390 = vld [vmem:[%s2 + $0xd0] sm:$0xf]
        %v391 = vld [vmem:[%s2 + $0xd4] sm:$0xf]
        %v392 = vld [vmem:[%s2 + $0xd8] sm:$0xf]
        %v393 = vld [vmem:[%s2 + $0xdc] sm:$0xf]
        %v394 = vld [vmem:[%s2 + $0xe0] sm:$0xf]
        %v395 = vld [vmem:[%s2 + $0xe4] sm:$0xf]
        %v396 = vld [vmem:[%s2 + $0xe8] sm:$0xf]
        %v397 = vld [vmem:[%s2 + $0xec] sm:$0xf]
        %v398 = vld [vmem:[%s2 + $0xf0] sm:$0xf]
        %v399 = vld [vmem:[%s2 + $0xf4] sm:$0xf]
        %v400 = vld [vmem:[%s2 + $0xf8] sm:$0xf]
        %v401 = vld [vmem:[%s2 + $0xfc] sm:$0xf]
        %v402 = vld [vmem:[%s2 + $0x100] sm:$0xf]
        %v403 = vld [vmem:[%s2 + $0x104] sm:$0xf]
        %v404 = vld [vmem:[%s2 + $0x108] sm:$0xf]
        %v405 = vld [vmem:[%s2 + $0x10c] sm:$0xf]
        %v406 = vld [vmem:[%s2 + $0x110] sm:$0xf]
        %v407 = vld [vmem:[%s2 + $0x114] sm:$0xf]
        %v408 = vld [vmem:[%s2 + $0x118] sm:$0xf]
        %v409 = vld [vmem:[%s2 + $0x11c] sm:$0xf]
        %v410 = vld [vmem:[%s2 + $0x120] sm:$0xf]
        %v411 = vld [vmem:[%s2 + $0x124] sm:$0xf]
        %v412 = vld [vmem:[%s2 + $0x128] sm:$0xf]
        %v413 = vld [vmem:[%s2 + $0x12c] sm:$0xf]
        %v414 = vld [vmem:[%s2 + $0x130] sm:$0xf]
        %v415 = vld [vmem:[%s2 + $0x134] sm:$0xf]
        %v416 = vld [vmem:[%s2 + $0x138] sm:$0xf]
        %v417 = vld [vmem:[%s2 + $0x13c] sm:$0xf]
        %v418 = vld [vmem:[%s2 + $0x140] sm:$0xf]
        %v419 = vld [vmem:[%s2 + $0x144] sm:$0xf]
        %v420 = vld [vmem:[%s2 + $0x148] sm:$0xf]
        %v421 = vld [vmem:[%s2 + $0x14c] sm:$0xf]
        %v422 = vld [vmem:[%s2 + $0x150] sm:$0xf]
        %v423 = vld [vmem:[%s2 + $0x154] sm:$0xf]
        %v424 = vld [vmem:[%s2 + $0x158] sm:$0xf]
        %v425 = vld [vmem:[%s2 + $0x15c] sm:$0xf]
        %v426 = vld [vmem:[%s2 + $0x160] sm:$0xf]
        %v427 = vld [vmem:[%s2 + $0x164] sm:$0xf]
        %v428 = vld [vmem:[%s2 + $0x168] sm:$0xf]
        %v429 = vld [vmem:[%s2 + $0x16c] sm:$0xf]
        %v430 = vld [vmem:[%s2 + $0x170] sm:$0xf]
        %v431 = vld [vmem:[%s2 + $0x174] sm:$0xf]
        %v432 = vld [vmem:[%s2 + $0x178] sm:$0xf]
        %v433 = vld [vmem:[%s2 + $0x17c] sm:$0xf]
        %v434 = vld [vmem:[%s2 + $0x180] sm:$0xf]
        %v435 = vld [vmem:[%s2 + $0x184] sm:$0xf]
        %v436 = vld [vmem:[%s2 + $0x188] sm:$0xf]
        %v437 = vld [vmem:[%s2 + $0x18c] sm:$0xf]
        %v438 = vld [vmem:[%s2 + $0x190] sm:$0xf]
        %v439 = vld [vmem:[%s2 + $0x194] sm:$0xf]
        %v440 = vld [vmem:[%s2 + $0x198] sm:$0xf]
        %v441 = vld [vmem:[%s2 + $0x19c] sm:$0xf]
        %v442 = vld [vmem:[%s2 + $0x1a0] sm:$0xf]
        %v443 = vld [vmem:[%s2 + $0x1a4] sm:$0xf]
        %v444 = vld [vmem:[%s2 + $0x1a8] sm:$0xf]
        %v445 = vld [vmem:[%s2 + $0x1ac] sm:$0xf]
        %v446 = vld [vmem:[%s2 + $0x1b0] sm:$0xf]
        %v447 = vld [vmem:[%s2 + $0x1b4] sm:$0xf]
        %v448 = vld [vmem:[%s2 + $0x1b8] sm:$0xf]
        %v449 = vld [vmem:[%s2 + $0x1bc] sm:$0xf]
        %v450 = vld [vmem:[%s4] sm:$0x1]
        %v452 = vperm.slane %v450, 0
        %v526 = vunpack.c.l.b16 %v266
        %v527 = vunpack.c.h.b16 %v266
        %v528 = vunpack.c.l.b16 %v267
        %v529 = vunpack.c.h.b16 %v267
        %v530 = vunpack.c.l.b16 %v268
        %v531 = vunpack.c.h.b16 %v268
        %v532 = vunpack.c.l.b16 %v269
        %v533 = vunpack.c.l.b16 %v270
        %v534 = vunpack.c.h.b16 %v270
        %v535 = vunpack.c.l.b16 %v271
        %v536 = vunpack.c.h.b16 %v271
        %v537 = vunpack.c.l.b16 %v272
        %v538 = vunpack.c.h.b16 %v272
        %v539 = vunpack.c.l.b16 %v273
        %v540 = vunpack.c.l.b16 %v274
        %v541 = vunpack.c.h.b16 %v274
        %v542 = vunpack.c.l.b16 %v275
        %v543 = vunpack.c.h.b16 %v275
        %v544 = vunpack.c.l.b16 %v276
        %v545 = vunpack.c.h.b16 %v276
        %v546 = vunpack.c.l.b16 %v277
        %v547 = vunpack.c.l.b16 %v278
        %v548 = vunpack.c.h.b16 %v278
        %v549 = vunpack.c.l.b16 %v279
        %v550 = vunpack.c.h.b16 %v279
        %v551 = vunpack.c.l.b16 %v280
        %v552 = vunpack.c.h.b16 %v280
        %v553 = vunpack.c.l.b16 %v281
        %v554 = vunpack.c.l.b16 %v282
        %v555 = vunpack.c.h.b16 %v282
        %v556 = vunpack.c.l.b16 %v283
        %v557 = vunpack.c.h.b16 %v283
        %v558 = vunpack.c.l.b16 %v284
        %v559 = vunpack.c.h.b16 %v284
        %v560 = vunpack.c.l.b16 %v285
        %v561 = vunpack.c.l.b16 %v286
        %v562 = vunpack.c.h.b16 %v286
        %v563 = vunpack.c.l.b16 %v287
        %v564 = vunpack.c.h.b16 %v287
        %v565 = vunpack.c.l.b16 %v288
        %v566 = vunpack.c.h.b16 %v288
        %v567 = vunpack.c.l.b16 %v289
        %v568 = vunpack.c.l.b16 %v290
        %v569 = vunpack.c.h.b16 %v290
        %v570 = vunpack.c.l.b16 %v291
        %v571 = vunpack.c.h.b16 %v291
        %v572 = vunpack.c.l.b16 %v292
        %v573 = vunpack.c.h.b16 %v292
        %v574 = vunpack.c.l.b16 %v293
        %v575 = vunpack.c.l.b16 %v294
        %v576 = vunpack.c.h.b16 %v294
        %v577 = vunpack.c.l.b16 %v295
        %v578 = vunpack.c.h.b16 %v295
        %v579 = vunpack.c.l.b16 %v296
        %v580 = vunpack.c.h.b16 %v296
        %v581 = vunpack.c.l.b16 %v297
        %v582 = vunpack.c.l.b16 %v298
        %v583 = vunpack.c.h.b16 %v298
        %v584 = vunpack.c.l.b16 %v299
        %v585 = vunpack.c.h.b16 %v299
        %v586 = vunpack.c.l.b16 %v300
        %v587 = vunpack.c.h.b16 %v300
        %v588 = vunpack.c.l.b16 %v301
        %v589 = vunpack.c.l.b16 %v302
        %v590 = vunpack.c.h.b16 %v302
        %v591 = vunpack.c.l.b16 %v303
        %v592 = vunpack.c.h.b16 %v303
        %v593 = vunpack.c.l.b16 %v304
        %v594 = vunpack.c.h.b16 %v304
        %v595 = vunpack.c.l.b16 %v305
        %v596 = vunpack.c.l.b16 %v306
        %v597 = vunpack.c.h.b16 %v306
        %v598 = vunpack.c.l.b16 %v307
        %v599 = vunpack.c.h.b16 %v307
        %v600 = vunpack.c.l.b16 %v308
        %v601 = vunpack.c.h.b16 %v308
        %v602 = vunpack.c.l.b16 %v309
        %v603 = vunpack.c.l.b16 %v310
        %v604 = vunpack.c.h.b16 %v310
        %v605 = vunpack.c.l.b16 %v311
        %v606 = vunpack.c.h.b16 %v311
        %v607 = vunpack.c.l.b16 %v312
        %v608 = vunpack.c.h.b16 %v312
        %v609 = vunpack.c.l.b16 %v313
        %v610 = vunpack.c.l.b16 %v314
        %v611 = vunpack.c.h.b16 %v314
        %v612 = vunpack.c.l.b16 %v315
        %v613 = vunpack.c.h.b16 %v315
        %v614 = vunpack.c.l.b16 %v316
        %v615 = vunpack.c.h.b16 %v316
        %v616 = vunpack.c.l.b16 %v317
        %v617 = vunpack.c.l.b16 %v318
        %v618 = vunpack.c.h.b16 %v318
        %v619 = vunpack.c.l.b16 %v319
        %v620 = vunpack.c.h.b16 %v319
        %v621 = vunpack.c.l.b16 %v320
        %v622 = vunpack.c.h.b16 %v320
        %v623 = vunpack.c.l.b16 %v321
        %v624 = vunpack.c.l.b16 %v322
        %v625 = vunpack.c.h.b16 %v322
        %v626 = vunpack.c.l.b16 %v323
        %v627 = vunpack.c.h.b16 %v323
        %v628 = vunpack.c.l.b16 %v324
        %v629 = vunpack.c.h.b16 %v324
        %v630 = vunpack.c.l.b16 %v325
        %v631 = vunpack.c.l.b16 %v326
        %v632 = vunpack.c.h.b16 %v326
        %v633 = vunpack.c.l.b16 %v327
        %v634 = vunpack.c.h.b16 %v327
        %v635 = vunpack.c.l.b16 %v328
        %v636 = vunpack.c.h.b16 %v328
        %v637 = vunpack.c.l.b16 %v329
        %v638 = vunpack.c.l.b16 %v330
        %v639 = vunpack.c.h.b16 %v330
        %v640 = vunpack.c.l.b16 %v331
        %v641 = vunpack.c.h.b16 %v331
        %v642 = vunpack.c.l.b16 %v332
        %v643 = vunpack.c.h.b16 %v332
        %v644 = vunpack.c.l.b16 %v333
        %v645 = vunpack.c.l.b16 %v334
        %v646 = vunpack.c.h.b16 %v334
        %v647 = vunpack.c.l.b16 %v335
        %v648 = vunpack.c.h.b16 %v335
        %v649 = vunpack.c.l.b16 %v336
        %v650 = vunpack.c.h.b16 %v336
        %v651 = vunpack.c.l.b16 %v337
        %v652 = vpack.c.b16 %v533, %v526
        %v653 = vpack.c.b16 %v534, %v527
        %v654 = vpack.c.b16 %v535, %v528
        %v655 = vpack.c.b16 %v536, %v529
        %v656 = vpack.c.b16 %v537, %v530
        %v657 = vpack.c.b16 %v538, %v531
        %v658 = vpack.c.b16 %v539, %v532
        %v659 = vpack.c.b16 %v547, %v540
        %v660 = vpack.c.b16 %v548, %v541
        %v661 = vpack.c.b16 %v549, %v542
        %v662 = vpack.c.b16 %v550, %v543
        %v663 = vpack.c.b16 %v551, %v544
        %v664 = vpack.c.b16 %v552, %v545
        %v665 = vpack.c.b16 %v553, %v546
        %v666 = vpack.c.b16 %v561, %v554
        %v667 = vpack.c.b16 %v562, %v555
        %v668 = vpack.c.b16 %v563, %v556
        %v669 = vpack.c.b16 %v564, %v557
        %v670 = vpack.c.b16 %v565, %v558
        %v671 = vpack.c.b16 %v566, %v559
        %v672 = vpack.c.b16 %v567, %v560
        %v673 = vpack.c.b16 %v575, %v568
        %v674 = vpack.c.b16 %v576, %v569
        %v675 = vpack.c.b16 %v577, %v570
        %v676 = vpack.c.b16 %v578, %v571
        %v677 = vpack.c.b16 %v579, %v572
        %v678 = vpack.c.b16 %v580, %v573
        %v679 = vpack.c.b16 %v581, %v574
        %v680 = vpack.c.b16 %v589, %v582
        %v681 = vpack.c.b16 %v590, %v583
        %v682 = vpack.c.b16 %v591, %v584
        %v683 = vpack.c.b16 %v592, %v585
        %v684 = vpack.c.b16 %v593, %v586
        %v685 = vpack.c.b16 %v594, %v587
        %v686 = vpack.c.b16 %v595, %v588
        %v687 = vpack.c.b16 %v603, %v596
        %v688 = vpack.c.b16 %v604, %v597
        %v689 = vpack.c.b16 %v605, %v598
        %v690 = vpack.c.b16 %v606, %v599
        %v691 = vpack.c.b16 %v607, %v600
        %v692 = vpack.c.b16 %v608, %v601
        %v693 = vpack.c.b16 %v609, %v602
        %v694 = vpack.c.b16 %v617, %v610
        %v695 = vpack.c.b16 %v618, %v611
        %v696 = vpack.c.b16 %v619, %v612
        %v697 = vpack.c.b16 %v620, %v613
        %v698 = vpack.c.b16 %v621, %v614
        %v699 = vpack.c.b16 %v622, %v615
        %v700 = vpack.c.b16 %v623, %v616
        %v701 = vpack.c.b16 %v631, %v624
        %v702 = vpack.c.b16 %v632, %v625
        %v703 = vpack.c.b16 %v633, %v626
        %v704 = vpack.c.b16 %v634, %v627
        %v705 = vpack.c.b16 %v635, %v628
        %v706 = vpack.c.b16 %v636, %v629
        %v707 = vpack.c.b16 %v637, %v630
        %v708 = vpack.c.b16 %v645, %v638
        %v709 = vpack.c.b16 %v646, %v639
        %v710 = vpack.c.b16 %v647, %v640
        %v711 = vpack.c.b16 %v648, %v641
        %v712 = vpack.c.b16 %v649, %v642
        %v713 = vpack.c.b16 %v650, %v643
        %v714 = vpack.c.b16 %v651, %v644
        %v890 = vunpack.c.l.b16 %v338
        %v891 = vunpack.c.l.b16 %v339
        %v892 = vunpack.c.l.b16 %v340
        %v893 = vunpack.c.l.b16 %v341
        %v894 = vunpack.c.l.b16 %v342
        %v895 = vunpack.c.l.b16 %v343
        %v896 = vunpack.c.l.b16 %v344
        %v897 = vunpack.c.l.b16 %v345
        %v898 = vunpack.c.l.b16 %v346
        %v899 = vunpack.c.l.b16 %v347
        %v900 = vunpack.c.l.b16 %v348
        %v901 = vunpack.c.l.b16 %v349
        %v902 = vunpack.c.l.b16 %v350
        %v903 = vunpack.c.l.b16 %v351
        %v904 = vunpack.c.l.b16 %v352
        %v905 = vunpack.c.l.b16 %v353
        %v906 = vunpack.c.l.b16 %v354
        %v907 = vunpack.c.l.b16 %v355
        %v908 = vunpack.c.l.b16 %v356
        %v909 = vunpack.c.l.b16 %v357
        %v910 = vunpack.c.l.b16 %v358
        %v911 = vunpack.c.l.b16 %v359
        %v912 = vunpack.c.l.b16 %v360
        %v913 = vunpack.c.l.b16 %v361
        %v914 = vunpack.c.l.b16 %v362
        %v915 = vunpack.c.l.b16 %v363
        %v916 = vunpack.c.l.b16 %v364
        %v917 = vunpack.c.l.b16 %v365
        %v918 = vunpack.c.l.b16 %v366
        %v919 = vunpack.c.l.b16 %v367
        %v920 = vunpack.c.l.b16 %v368
        %v921 = vunpack.c.l.b16 %v369
        %v922 = vunpack.c.l.b16 %v370
        %v923 = vunpack.c.l.b16 %v371
        %v924 = vunpack.c.l.b16 %v372
        %v925 = vunpack.c.l.b16 %v373
        %v926 = vunpack.c.l.b16 %v374
        %v927 = vunpack.c.l.b16 %v375
        %v928 = vunpack.c.l.b16 %v376
        %v929 = vunpack.c.l.b16 %v377
        %v930 = vunpack.c.l.b16 %v378
        %v931 = vunpack.c.l.b16 %v379
        %v932 = vunpack.c.l.b16 %v380
        %v933 = vunpack.c.l.b16 %v381
        %v934 = vunpack.c.l.b16 %v382
        %v935 = vunpack.c.l.b16 %v383
        %v936 = vunpack.c.l.b16 %v384
        %v937 = vunpack.c.l.b16 %v385
        %v938 = vunpack.c.l.b16 %v386
        %v939 = vunpack.c.l.b16 %v387
        %v940 = vunpack.c.l.b16 %v388
        %v941 = vunpack.c.l.b16 %v389
        %v942 = vunpack.c.l.b16 %v390
        %v943 = vunpack.c.l.b16 %v391
        %v944 = vunpack.c.l.b16 %v392
        %v945 = vunpack.c.l.b16 %v393
        %v946 = vunpack.c.l.b16 %v394
        %v947 = vunpack.c.l.b16 %v395
        %v948 = vunpack.c.l.b16 %v396
        %v949 = vunpack.c.l.b16 %v397
        %v950 = vunpack.c.l.b16 %v398
        %v951 = vunpack.c.l.b16 %v399
        %v952 = vunpack.c.l.b16 %v400
        %v953 = vunpack.c.l.b16 %v401
        %v954 = vunpack.c.l.b16 %v402
        %v955 = vunpack.c.l.b16 %v403
        %v956 = vunpack.c.l.b16 %v404
        %v957 = vunpack.c.l.b16 %v405
        %v958 = vunpack.c.l.b16 %v406
        %v959 = vunpack.c.l.b16 %v407
        %v960 = vunpack.c.l.b16 %v408
        %v961 = vunpack.c.l.b16 %v409
        %v962 = vunpack.c.l.b16 %v410
        %v963 = vunpack.c.l.b16 %v411
        %v964 = vunpack.c.l.b16 %v412
        %v965 = vunpack.c.l.b16 %v413
        %v966 = vunpack.c.l.b16 %v414
        %v967 = vunpack.c.l.b16 %v415
        %v968 = vunpack.c.l.b16 %v416
        %v969 = vunpack.c.l.b16 %v417
        %v970 = vunpack.c.l.b16 %v418
        %v971 = vunpack.c.l.b16 %v419
        %v972 = vunpack.c.l.b16 %v420
        %v973 = vunpack.c.l.b16 %v421
        %v974 = vunpack.c.l.b16 %v422
        %v975 = vunpack.c.l.b16 %v423
        %v976 = vunpack.c.l.b16 %v424
        %v977 = vunpack.c.l.b16 %v425
        %v978 = vunpack.c.l.b16 %v426
        %v979 = vunpack.c.l.b16 %v427
        %v980 = vunpack.c.l.b16 %v428
        %v981 = vunpack.c.l.b16 %v429
        %v982 = vunpack.c.l.b16 %v430
        %v983 = vunpack.c.l.b16 %v431
        %v984 = vunpack.c.l.b16 %v432
        %v985 = vunpack.c.l.b16 %v433
        %v986 = vunpack.c.l.b16 %v434
        %v987 = vunpack.c.l.b16 %v435
        %v988 = vunpack.c.l.b16 %v436
        %v989 = vunpack.c.l.b16 %v437
        %v990 = vunpack.c.l.b16 %v438
        %v991 = vunpack.c.l.b16 %v439
        %v992 = vunpack.c.l.b16 %v440
        %v993 = vunpack.c.l.b16 %v441
        %v994 = vunpack.c.l.b16 %v442
        %v995 = vunpack.c.l.b16 %v443
        %v996 = vunpack.c.l.b16 %v444
        %v997 = vunpack.c.l.b16 %v445
        %v998 = vunpack.c.l.b16 %v446
        %v999 = vunpack.c.l.b16 %v447
        %v1000 = vunpack.c.l.b16 %v448
        %v1001 = vunpack.c.l.b16 %v449
        %v1002 = vpack.c.b16 %v891, %v890
        %v1003 = vpack.c.b16 %v893, %v892
        %v1004 = vpack.c.b16 %v895, %v894
        %v1005 = vpack.c.b16 %v897, %v896
        %v1006 = vpack.c.b16 %v899, %v898
        %v1007 = vpack.c.b16 %v901, %v900
        %v1008 = vpack.c.b16 %v903, %v902
        %v1009 = vpack.c.b16 %v905, %v904
        %v1010 = vpack.c.b16 %v907, %v906
        %v1011 = vpack.c.b16 %v909, %v908
        %v1012 = vpack.c.b16 %v911, %v910
        %v1013 = vpack.c.b16 %v913, %v912
        %v1014 = vpack.c.b16 %v915, %v914
        %v1015 = vpack.c.b16 %v917, %v916
        %v1016 = vpack.c.b16 %v919, %v918
        %v1017 = vpack.c.b16 %v921, %v920
        %v1018 = vpack.c.b16 %v923, %v922
        %v1019 = vpack.c.b16 %v925, %v924
        %v1020 = vpack.c.b16 %v927, %v926
        %v1021 = vpack.c.b16 %v929, %v928
        %v1022 = vpack.c.b16 %v931, %v930
        %v1023 = vpack.c.b16 %v933, %v932
        %v1024 = vpack.c.b16 %v935, %v934
        %v1025 = vpack.c.b16 %v937, %v936
        %v1026 = vpack.c.b16 %v939, %v938
        %v1027 = vpack.c.b16 %v941, %v940
        %v1028 = vpack.c.b16 %v943, %v942
        %v1029 = vpack.c.b16 %v945, %v944
        %v1030 = vpack.c.b16 %v947, %v946
        %v1031 = vpack.c.b16 %v949, %v948
        %v1032 = vpack.c.b16 %v951, %v950
        %v1033 = vpack.c.b16 %v953, %v952
        %v1034 = vpack.c.b16 %v955, %v954
        %v1035 = vpack.c.b16 %v957, %v956
        %v1036 = vpack.c.b16 %v959, %v958
        %v1037 = vpack.c.b16 %v961, %v960
        %v1038 = vpack.c.b16 %v963, %v962
        %v1039 = vpack.c.b16 %v965, %v964
        %v1040 = vpack.c.b16 %v967, %v966
        %v1041 = vpack.c.b16 %v969, %v968
        %v1042 = vpack.c.b16 %v971, %v970
        %v1043 = vpack.c.b16 %v973, %v972
        %v1044 = vpack.c.b16 %v975, %v974
        %v1045 = vpack.c.b16 %v977, %v976
        %v1046 = vpack.c.b16 %v979, %v978
        %v1047 = vpack.c.b16 %v981, %v980
        %v1048 = vpack.c.b16 %v983, %v982
        %v1049 = vpack.c.b16 %v985, %v984
        %v1050 = vpack.c.b16 %v987, %v986
        %v1051 = vpack.c.b16 %v989, %v988
        %v1052 = vpack.c.b16 %v991, %v990
        %v1053 = vpack.c.b16 %v993, %v992
        %v1054 = vpack.c.b16 %v995, %v994
        %v1055 = vpack.c.b16 %v997, %v996
        %v1056 = vpack.c.b16 %v999, %v998
        %v1057 = vpack.c.b16 %v1001, %v1000
        %1114 = vmatpush.bf16.msra.mxu0 %v1009
        %1115 = vmatpush.bf16.msra.mxu0 %v1008
        %1116 = vmatpush.bf16.msra.mxu0 %v1007
        %1117 = vmatpush.bf16.msra.mxu0 %v1006
        %1118 = vmatpush.bf16.msra.mxu0 %v1005
        %1119 = vmatpush.bf16.msra.mxu0 %v1004
        %1120 = vmatpush.bf16.msra.mxu0 %v1003
        %1121 = vmatpush.bf16.msra.mxu0 %v1002
        %1122 = vmatmul.bf16.gmra.mxu0 %v652
        %v1123 = vpop.f32.mrf.mxu0
        %v1124 = vadd.f32 %v452, %v1123
        %v1125 = vpop.f32.mrf.mxu0
        %v1126 = vadd.f32 %v452, %v1125
        %1127 = vmatmul.bf16.gmra.mxu0 %v659
        %v1128 = vpop.f32.mrf.mxu0
        %v1129 = vadd.f32 %v452, %v1128
        %v1130 = vpop.f32.mrf.mxu0
        %v1131 = vadd.f32 %v452, %v1130
        %1132 = vmatmul.bf16.gmra.mxu0 %v666
        %v1133 = vpop.f32.mrf.mxu0
        %v1134 = vadd.f32 %v452, %v1133
        %v1135 = vpop.f32.mrf.mxu0
        %v1136 = vadd.f32 %v452, %v1135
        %1137 = vmatmul.bf16.gmra.mxu0 %v673
        %v1138 = vpop.f32.mrf.mxu0
        %v1139 = vadd.f32 %v452, %v1138
        %v1140 = vpop.f32.mrf.mxu0
        %v1141 = vadd.f32 %v452, %v1140
        %1142 = vmatmul.bf16.gmra.mxu0 %v680
        %v1143 = vpop.f32.mrf.mxu0
        %v1144 = vadd.f32 %v452, %v1143
        %v1145 = vpop.f32.mrf.mxu0
        %v1146 = vadd.f32 %v452, %v1145
        %1147 = vmatmul.bf16.gmra.mxu0 %v687
        %v1148 = vpop.f32.mrf.mxu0
        %v1149 = vadd.f32 %v452, %v1148
        %v1150 = vpop.f32.mrf.mxu0
        %v1151 = vadd.f32 %v452, %v1150
        %1152 = vmatmul.bf16.gmra.mxu0 %v694
        %v1153 = vpop.f32.mrf.mxu0
        %v1154 = vadd.f32 %v452, %v1153
        %v1155 = vpop.f32.mrf.mxu0
        %v1156 = vadd.f32 %v452, %v1155
        %1157 = vmatmul.bf16.gmra.mxu0 %v701
        %v1158 = vpop.f32.mrf.mxu0
        %v1159 = vadd.f32 %v452, %v1158
        %v1160 = vpop.f32.mrf.mxu0
        %v1161 = vadd.f32 %v452, %v1160
        %1162 = vmatmul.bf16.gmra.mxu0 %v708
        %v1163 = vpop.f32.mrf.mxu0
        %v1164 = vadd.f32 %v452, %v1163
        %v1165 = vpop.f32.mrf.mxu0
        %v1166 = vadd.f32 %v452, %v1165
        %1167 = vdwg.mxu0
        %1168 = vmatpush.bf16.msra.mxu0 %v1017
        %1169 = vmatpush.bf16.msra.mxu0 %v1016
        %1170 = vmatpush.bf16.msra.mxu0 %v1015
        %1171 = vmatpush.bf16.msra.mxu0 %v1014
        %1172 = vmatpush.bf16.msra.mxu0 %v1013
        %1173 = vmatpush.bf16.msra.mxu0 %v1012
        %1174 = vmatpush.bf16.msra.mxu0 %v1011
        %1175 = vmatpush.bf16.msra.mxu0 %v1010
        %1176 = vmatmul.bf16.gmra.mxu0 %v653
        %v1177 = vpop.f32.mrf.mxu0
        %v1178 = vadd.f32 %v1124, %v1177
        %v1179 = vpop.f32.mrf.mxu0
        %v1180 = vadd.f32 %v1126, %v1179
        %1181 = vmatmul.bf16.gmra.mxu0 %v660
        %v1182 = vpop.f32.mrf.mxu0
        %v1183 = vadd.f32 %v1129, %v1182
        %v1184 = vpop.f32.mrf.mxu0
        %v1185 = vadd.f32 %v1131, %v1184
        %1186 = vmatmul.bf16.gmra.mxu0 %v667
        %v1187 = vpop.f32.mrf.mxu0
        %v1188 = vadd.f32 %v1134, %v1187
        %v1189 = vpop.f32.mrf.mxu0
        %v1190 = vadd.f32 %v1136, %v1189
        %1191 = vmatmul.bf16.gmra.mxu0 %v674
        %v1192 = vpop.f32.mrf.mxu0
        %v1193 = vadd.f32 %v1139, %v1192
        %v1194 = vpop.f32.mrf.mxu0
        %v1195 = vadd.f32 %v1141, %v1194
        %1196 = vmatmul.bf16.gmra.mxu0 %v681
        %v1197 = vpop.f32.mrf.mxu0
        %v1198 = vadd.f32 %v1144, %v1197
        %v1199 = vpop.f32.mrf.mxu0
        %v1200 = vadd.f32 %v1146, %v1199
        %1201 = vmatmul.bf16.gmra.mxu0 %v688
        %v1202 = vpop.f32.mrf.mxu0
        %v1203 = vadd.f32 %v1149, %v1202
        %v1204 = vpop.f32.mrf.mxu0
        %v1205 = vadd.f32 %v1151, %v1204
        %1206 = vmatmul.bf16.gmra.mxu0 %v695
        %v1207 = vpop.f32.mrf.mxu0
        %v1208 = vadd.f32 %v1154, %v1207
        %v1209 = vpop.f32.mrf.mxu0
        %v1210 = vadd.f32 %v1156, %v1209
        %1211 = vmatmul.bf16.gmra.mxu0 %v702
        %v1212 = vpop.f32.mrf.mxu0
        %v1213 = vadd.f32 %v1159, %v1212
        %v1214 = vpop.f32.mrf.mxu0
        %v1215 = vadd.f32 %v1161, %v1214
        %1216 = vmatmul.bf16.gmra.mxu0 %v709
        %v1217 = vpop.f32.mrf.mxu0
        %v1218 = vadd.f32 %v1164, %v1217
        %v1219 = vpop.f32.mrf.mxu0
        %v1220 = vadd.f32 %v1166, %v1219
        %1221 = vdwg.mxu0
        %1222 = vmatpush.bf16.msra.mxu0 %v1025
        %1223 = vmatpush.bf16.msra.mxu0 %v1024
        %1224 = vmatpush.bf16.msra.mxu0 %v1023
        %1225 = vmatpush.bf16.msra.mxu0 %v1022
        %1226 = vmatpush.bf16.msra.mxu0 %v1021
        %1227 = vmatpush.bf16.msra.mxu0 %v1020
        %1228 = vmatpush.bf16.msra.mxu0 %v1019
        %1229 = vmatpush.bf16.msra.mxu0 %v1018
        %1230 = vmatmul.bf16.gmra.mxu0 %v654
        %v1231 = vpop.f32.mrf.mxu0
        %v1232 = vadd.f32 %v1178, %v1231
        %v1233 = vpop.f32.mrf.mxu0
        %v1234 = vadd.f32 %v1180, %v1233
        %1235 = vmatmul.bf16.gmra.mxu0 %v661
        %v1236 = vpop.f32.mrf.mxu0
        %v1237 = vadd.f32 %v1183, %v1236
        %v1238 = vpop.f32.mrf.mxu0
        %v1239 = vadd.f32 %v1185, %v1238
        %1240 = vmatmul.bf16.gmra.mxu0 %v668
        %v1241 = vpop.f32.mrf.mxu0
        %v1242 = vadd.f32 %v1188, %v1241
        %v1243 = vpop.f32.mrf.mxu0
        %v1244 = vadd.f32 %v1190, %v1243
        %1245 = vmatmul.bf16.gmra.mxu0 %v675
        %v1246 = vpop.f32.mrf.mxu0
        %v1247 = vadd.f32 %v1193, %v1246
        %v1248 = vpop.f32.mrf.mxu0
        %v1249 = vadd.f32 %v1195, %v1248
        %1250 = vmatmul.bf16.gmra.mxu0 %v682
        %v1251 = vpop.f32.mrf.mxu0
        %v1252 = vadd.f32 %v1198, %v1251
        %v1253 = vpop.f32.mrf.mxu0
        %v1254 = vadd.f32 %v1200, %v1253
        %1255 = vmatmul.bf16.gmra.mxu0 %v689
        %v1256 = vpop.f32.mrf.mxu0
        %v1257 = vadd.f32 %v1203, %v1256
        %v1258 = vpop.f32.mrf.mxu0
        %v1259 = vadd.f32 %v1205, %v1258
        %1260 = vmatmul.bf16.gmra.mxu0 %v696
        %v1261 = vpop.f32.mrf.mxu0
        %v1262 = vadd.f32 %v1208, %v1261
        %v1263 = vpop.f32.mrf.mxu0
        %v1264 = vadd.f32 %v1210, %v1263
        %1265 = vmatmul.bf16.gmra.mxu0 %v703
        %v1266 = vpop.f32.mrf.mxu0
        %v1267 = vadd.f32 %v1213, %v1266
        %v1268 = vpop.f32.mrf.mxu0
        %v1269 = vadd.f32 %v1215, %v1268
        %1270 = vmatmul.bf16.gmra.mxu0 %v710
        %v1271 = vpop.f32.mrf.mxu0
        %v1272 = vadd.f32 %v1218, %v1271
        %v1273 = vpop.f32.mrf.mxu0
        %v1274 = vadd.f32 %v1220, %v1273
        %1275 = vdwg.mxu0
        %1276 = vmatpush.bf16.msra.mxu0 %v1033
        %1277 = vmatpush.bf16.msra.mxu0 %v1032
        %1278 = vmatpush.bf16.msra.mxu0 %v1031
        %1279 = vmatpush.bf16.msra.mxu0 %v1030
        %1280 = vmatpush.bf16.msra.mxu0 %v1029
        %1281 = vmatpush.bf16.msra.mxu0 %v1028
        %1282 = vmatpush.bf16.msra.mxu0 %v1027
        %1283 = vmatpush.bf16.msra.mxu0 %v1026
        %1284 = vmatmul.bf16.gmra.mxu0 %v655
        %v1285 = vpop.f32.mrf.mxu0
        %v1286 = vadd.f32 %v1232, %v1285
        %v1287 = vpop.f32.mrf.mxu0
        %v1288 = vadd.f32 %v1234, %v1287
        %1289 = vmatmul.bf16.gmra.mxu0 %v662
        %v1290 = vpop.f32.mrf.mxu0
        %v1291 = vadd.f32 %v1237, %v1290
        %v1292 = vpop.f32.mrf.mxu0
        %v1293 = vadd.f32 %v1239, %v1292
        %1294 = vmatmul.bf16.gmra.mxu0 %v669
        %v1295 = vpop.f32.mrf.mxu0
        %v1296 = vadd.f32 %v1242, %v1295
        %v1297 = vpop.f32.mrf.mxu0
        %v1298 = vadd.f32 %v1244, %v1297
        %1299 = vmatmul.bf16.gmra.mxu0 %v676
        %v1300 = vpop.f32.mrf.mxu0
        %v1301 = vadd.f32 %v1247, %v1300
        %v1302 = vpop.f32.mrf.mxu0
        %v1303 = vadd.f32 %v1249, %v1302
        %1304 = vmatmul.bf16.gmra.mxu0 %v683
        %v1305 = vpop.f32.mrf.mxu0
        %v1306 = vadd.f32 %v1252, %v1305
        %v1307 = vpop.f32.mrf.mxu0
        %v1308 = vadd.f32 %v1254, %v1307
        %1309 = vmatmul.bf16.gmra.mxu0 %v690
        %v1310 = vpop.f32.mrf.mxu0
        %v1311 = vadd.f32 %v1257, %v1310
        %v1312 = vpop.f32.mrf.mxu0
        %v1313 = vadd.f32 %v1259, %v1312
        %1314 = vmatmul.bf16.gmra.mxu0 %v697
        %v1315 = vpop.f32.mrf.mxu0
        %v1316 = vadd.f32 %v1262, %v1315
        %v1317 = vpop.f32.mrf.mxu0
        %v1318 = vadd.f32 %v1264, %v1317
        %1319 = vmatmul.bf16.gmra.mxu0 %v704
        %v1320 = vpop.f32.mrf.mxu0
        %v1321 = vadd.f32 %v1267, %v1320
        %v1322 = vpop.f32.mrf.mxu0
        %v1323 = vadd.f32 %v1269, %v1322
        %1324 = vmatmul.bf16.gmra.mxu0 %v711
        %v1325 = vpop.f32.mrf.mxu0
        %v1326 = vadd.f32 %v1272, %v1325
        %v1327 = vpop.f32.mrf.mxu0
        %v1328 = vadd.f32 %v1274, %v1327
        %1329 = vdwg.mxu0
        %1330 = vmatpush.bf16.msra.mxu0 %v1041
        %1331 = vmatpush.bf16.msra.mxu0 %v1040
        %1332 = vmatpush.bf16.msra.mxu0 %v1039
        %1333 = vmatpush.bf16.msra.mxu0 %v1038
        %1334 = vmatpush.bf16.msra.mxu0 %v1037
        %1335 = vmatpush.bf16.msra.mxu0 %v1036
        %1336 = vmatpush.bf16.msra.mxu0 %v1035
        %1337 = vmatpush.bf16.msra.mxu0 %v1034
        %1338 = vmatmul.bf16.gmra.mxu0 %v656
        %v1339 = vpop.f32.mrf.mxu0
        %v1340 = vadd.f32 %v1286, %v1339
        %v1341 = vpop.f32.mrf.mxu0
        %v1342 = vadd.f32 %v1288, %v1341
        %1343 = vmatmul.bf16.gmra.mxu0 %v663
        %v1344 = vpop.f32.mrf.mxu0
        %v1345 = vadd.f32 %v1291, %v1344
        %v1346 = vpop.f32.mrf.mxu0
        %v1347 = vadd.f32 %v1293, %v1346
        %1348 = vmatmul.bf16.gmra.mxu0 %v670
        %v1349 = vpop.f32.mrf.mxu0
        %v1350 = vadd.f32 %v1296, %v1349
        %v1351 = vpop.f32.mrf.mxu0
        %v1352 = vadd.f32 %v1298, %v1351
        %1353 = vmatmul.bf16.gmra.mxu0 %v677
        %v1354 = vpop.f32.mrf.mxu0
        %v1355 = vadd.f32 %v1301, %v1354
        %v1356 = vpop.f32.mrf.mxu0
        %v1357 = vadd.f32 %v1303, %v1356
        %1358 = vmatmul.bf16.gmra.mxu0 %v684
        %v1359 = vpop.f32.mrf.mxu0
        %v1360 = vadd.f32 %v1306, %v1359
        %v1361 = vpop.f32.mrf.mxu0
        %v1362 = vadd.f32 %v1308, %v1361
        %1363 = vmatmul.bf16.gmra.mxu0 %v691
        %v1364 = vpop.f32.mrf.mxu0
        %v1365 = vadd.f32 %v1311, %v1364
        %v1366 = vpop.f32.mrf.mxu0
        %v1367 = vadd.f32 %v1313, %v1366
        %1368 = vmatmul.bf16.gmra.mxu0 %v698
        %v1369 = vpop.f32.mrf.mxu0
        %v1370 = vadd.f32 %v1316, %v1369
        %v1371 = vpop.f32.mrf.mxu0
        %v1372 = vadd.f32 %v1318, %v1371
        %1373 = vmatmul.bf16.gmra.mxu0 %v705
        %v1374 = vpop.f32.mrf.mxu0
        %v1375 = vadd.f32 %v1321, %v1374
        %v1376 = vpop.f32.mrf.mxu0
        %v1377 = vadd.f32 %v1323, %v1376
        %1378 = vmatmul.bf16.gmra.mxu0 %v712
        %v1379 = vpop.f32.mrf.mxu0
        %v1380 = vadd.f32 %v1326, %v1379
        %v1381 = vpop.f32.mrf.mxu0
        %v1382 = vadd.f32 %v1328, %v1381
        %1383 = vdwg.mxu0
        %1384 = vmatpush.bf16.msra.mxu0 %v1049
        %1385 = vmatpush.bf16.msra.mxu0 %v1048
        %1386 = vmatpush.bf16.msra.mxu0 %v1047
        %1387 = vmatpush.bf16.msra.mxu0 %v1046
        %1388 = vmatpush.bf16.msra.mxu0 %v1045
        %1389 = vmatpush.bf16.msra.mxu0 %v1044
        %1390 = vmatpush.bf16.msra.mxu0 %v1043
        %1391 = vmatpush.bf16.msra.mxu0 %v1042
        %1392 = vmatmul.bf16.gmra.mxu0 %v657
        %v1393 = vpop.f32.mrf.mxu0
        %v1394 = vadd.f32 %v1340, %v1393
        %v1395 = vpop.f32.mrf.mxu0
        %v1396 = vadd.f32 %v1342, %v1395
        %1397 = vmatmul.bf16.gmra.mxu0 %v664
        %v1398 = vpop.f32.mrf.mxu0
        %v1399 = vadd.f32 %v1345, %v1398
        %v1400 = vpop.f32.mrf.mxu0
        %v1401 = vadd.f32 %v1347, %v1400
        %1402 = vmatmul.bf16.gmra.mxu0 %v671
        %v1403 = vpop.f32.mrf.mxu0
        %v1404 = vadd.f32 %v1350, %v1403
        %v1405 = vpop.f32.mrf.mxu0
        %v1406 = vadd.f32 %v1352, %v1405
        %1407 = vmatmul.bf16.gmra.mxu0 %v678
        %v1408 = vpop.f32.mrf.mxu0
        %v1409 = vadd.f32 %v1355, %v1408
        %v1410 = vpop.f32.mrf.mxu0
        %v1411 = vadd.f32 %v1357, %v1410
        %1412 = vmatmul.bf16.gmra.mxu0 %v685
        %v1413 = vpop.f32.mrf.mxu0
        %v1414 = vadd.f32 %v1360, %v1413
        %v1415 = vpop.f32.mrf.mxu0
        %v1416 = vadd.f32 %v1362, %v1415
        %1417 = vmatmul.bf16.gmra.mxu0 %v692
        %v1418 = vpop.f32.mrf.mxu0
        %v1419 = vadd.f32 %v1365, %v1418
        %v1420 = vpop.f32.mrf.mxu0
        %v1421 = vadd.f32 %v1367, %v1420
        %1422 = vmatmul.bf16.gmra.mxu0 %v699
        %v1423 = vpop.f32.mrf.mxu0
        %v1424 = vadd.f32 %v1370, %v1423
        %v1425 = vpop.f32.mrf.mxu0
        %v1426 = vadd.f32 %v1372, %v1425
        %1427 = vmatmul.bf16.gmra.mxu0 %v706
        %v1428 = vpop.f32.mrf.mxu0
        %v1429 = vadd.f32 %v1375, %v1428
        %v1430 = vpop.f32.mrf.mxu0
        %v1431 = vadd.f32 %v1377, %v1430
        %1432 = vmatmul.bf16.gmra.mxu0 %v713
        %v1433 = vpop.f32.mrf.mxu0
        %v1434 = vadd.f32 %v1380, %v1433
        %v1435 = vpop.f32.mrf.mxu0
        %v1436 = vadd.f32 %v1382, %v1435
        %1437 = vdwg.mxu0
        %1438 = vmatpush.bf16.msra.mxu0 %v1057
        %1439 = vmatpush.bf16.msra.mxu0 %v1056
        %1440 = vmatpush.bf16.msra.mxu0 %v1055
        %1441 = vmatpush.bf16.msra.mxu0 %v1054
        %1442 = vmatpush.bf16.msra.mxu0 %v1053
        %1443 = vmatpush.bf16.msra.mxu0 %v1052
        %1444 = vmatpush.bf16.msra.mxu0 %v1051
        %1445 = vmatpush.bf16.msra.mxu0 %v1050
        %1446 = vmatmul.bf16.gmra.mxu0 %v658
        %v1447 = vpop.f32.mrf.mxu0
        %v1448 = vadd.f32 %v1394, %v1447
        %v1449 = vpop.f32.mrf.mxu0
        %v1450 = vadd.f32 %v1396, %v1449
        %1451 = vmatmul.bf16.gmra.mxu0 %v665
        %v1452 = vpop.f32.mrf.mxu0
        %v1453 = vadd.f32 %v1399, %v1452
        %v1454 = vpop.f32.mrf.mxu0
        %v1455 = vadd.f32 %v1401, %v1454
        %1456 = vmatmul.bf16.gmra.mxu0 %v672
        %v1457 = vpop.f32.mrf.mxu0
        %v1458 = vadd.f32 %v1404, %v1457
        %v1459 = vpop.f32.mrf.mxu0
        %v1460 = vadd.f32 %v1406, %v1459
        %1461 = vmatmul.bf16.gmra.mxu0 %v679
        %v1462 = vpop.f32.mrf.mxu0
        %v1463 = vadd.f32 %v1409, %v1462
        %v1464 = vpop.f32.mrf.mxu0
        %v1465 = vadd.f32 %v1411, %v1464
        %1466 = vmatmul.bf16.gmra.mxu0 %v686
        %v1467 = vpop.f32.mrf.mxu0
        %v1468 = vadd.f32 %v1414, %v1467
        %v1469 = vpop.f32.mrf.mxu0
        %v1470 = vadd.f32 %v1416, %v1469
        %1471 = vmatmul.bf16.gmra.mxu0 %v693
        %v1472 = vpop.f32.mrf.mxu0
        %v1473 = vadd.f32 %v1419, %v1472
        %v1474 = vpop.f32.mrf.mxu0
        %v1475 = vadd.f32 %v1421, %v1474
        %1476 = vmatmul.bf16.gmra.mxu0 %v700
        %v1477 = vpop.f32.mrf.mxu0
        %v1478 = vadd.f32 %v1424, %v1477
        %v1479 = vpop.f32.mrf.mxu0
        %v1480 = vadd.f32 %v1426, %v1479
        %1481 = vmatmul.bf16.gmra.mxu0 %v707
        %v1482 = vpop.f32.mrf.mxu0
        %v1483 = vadd.f32 %v1429, %v1482
        %v1484 = vpop.f32.mrf.mxu0
        %v1485 = vadd.f32 %v1431, %v1484
        %1486 = vmatmul.bf16.gmra.mxu0 %v714
        %v1487 = vpop.f32.mrf.mxu0
        %v1488 = vadd.f32 %v1434, %v1487
        %v1489 = vpop.f32.mrf.mxu0
        %v1490 = vadd.f32 %v1436, %v1489
        %1491 = vdwg.mxu0
        %vm1492 = vcmp.gt.f32.partialorder %v1448, 0.0
        %vm1493 = vcmp.gt.f32.partialorder %v1450, 0.0
        %vm1494 = vcmp.gt.f32.partialorder %v1453, 0.0
        %vm1495 = vcmp.gt.f32.partialorder %v1455, 0.0
        %vm1496 = vcmp.gt.f32.partialorder %v1458, 0.0
        %vm1497 = vcmp.gt.f32.partialorder %v1460, 0.0
        %vm1498 = vcmp.gt.f32.partialorder %v1463, 0.0
        %vm1499 = vcmp.gt.f32.partialorder %v1465, 0.0
        %vm1500 = vcmp.gt.f32.partialorder %v1468, 0.0
        %vm1501 = vcmp.gt.f32.partialorder %v1470, 0.0
        %vm1502 = vcmp.gt.f32.partialorder %v1473, 0.0
        %vm1503 = vcmp.gt.f32.partialorder %v1475, 0.0
        %vm1504 = vcmp.gt.f32.partialorder %v1478, 0.0
        %vm1505 = vcmp.gt.f32.partialorder %v1480, 0.0
        %vm1506 = vcmp.gt.f32.partialorder %v1483, 0.0
        %vm1507 = vcmp.gt.f32.partialorder %v1485, 0.0
        %vm1508 = vcmp.gt.f32.partialorder %v1488, 0.0
        %vm1509 = vcmp.gt.f32.partialorder %v1490, 0.0
        %v1510 = vmul.f32 %v1448, -0.132
        %v1511 = vmul.f32 %v1450, -0.132
        %v1512 = vmul.f32 %v1453, -0.132
        %v1513 = vmul.f32 %v1455, -0.132
        %v1514 = vmul.f32 %v1458, -0.132
        %v1515 = vmul.f32 %v1460, -0.132
        %v1516 = vmul.f32 %v1463, -0.132
        %v1517 = vmul.f32 %v1465, -0.132
        %v1518 = vmul.f32 %v1468, -0.132
        %v1519 = vmul.f32 %v1470, -0.132
        %v1520 = vmul.f32 %v1473, -0.132
        %v1521 = vmul.f32 %v1475, -0.132
        %v1522 = vmul.f32 %v1478, -0.132
        %v1523 = vmul.f32 %v1480, -0.132
        %v1524 = vmul.f32 %v1483, -0.132
        %v1525 = vmul.f32 %v1485, -0.132
        %v1526 = vmul.f32 %v1488, -0.132
        %v1527 = vmul.f32 %v1490, -0.132
        %v1528 = vsel %vm1492, %v1448, %v1510
        %v1529 = vsel %vm1493, %v1450, %v1511
        %v1530 = vsel %vm1494, %v1453, %v1512
        %v1531 = vsel %vm1495, %v1455, %v1513
        %v1532 = vsel %vm1496, %v1458, %v1514
        %v1533 = vsel %vm1497, %v1460, %v1515
        %v1534 = vsel %vm1498, %v1463, %v1516
        %v1535 = vsel %vm1499, %v1465, %v1517
        %v1536 = vsel %vm1500, %v1468, %v1518
        %v1537 = vsel %vm1501, %v1470, %v1519
        %v1538 = vsel %vm1502, %v1473, %v1520
        %v1539 = vsel %vm1503, %v1475, %v1521
        %v1540 = vsel %vm1504, %v1478, %v1522
        %v1541 = vsel %vm1505, %v1480, %v1523
        %v1542 = vsel %vm1506, %v1483, %v1524
        %v1543 = vsel %vm1507, %v1485, %v1525
        %v1544 = vsel %vm1508, %v1488, %v1526
        %v1545 = vsel %vm1509, %v1490, %v1527
        %v1546 = vadd.f32 %v1528, %v1529
        %v1547 = vadd.f32 %v1546, %v1530
        %v1548 = vadd.f32 %v1547, %v1531
        %v1549 = vadd.f32 %v1548, %v1532
        %v1550 = vadd.f32 %v1549, %v1533
        %v1551 = vadd.f32 %v1550, %v1534
        %v1552 = vadd.f32 %v1551, %v1535
        %v1553 = vadd.f32 %v1552, %v1536
        %v1554 = vadd.f32 %v1553, %v1537
        %v1555 = vadd.f32 %v1554, %v1538
        %v1556 = vadd.f32 %v1555, %v1539
        %v1557 = vadd.f32 %v1556, %v1540
        %v1558 = vadd.f32 %v1557, %v1541
        %v1559 = vadd.f32 %v1558, %v1542
        %v1560 = vadd.f32 %v1559, %v1543
        %v1561 = vadd.f32 %v1560, %v1544
        %v1562 = vadd.f32 %v1561, %v1545
        %v1563 = vrot.slane %v1562, 4
        %v1564 = vadd.f32 %v1562, %v1563
        %v1565 = vrot.slane %v1564, 2
        %v1566 = vadd.f32 %v1564, %v1565
        %v1567 = vrot.slane %v1566, 1
        %v1568 = vadd.f32 %v1566, %v1567
        %v1569 = vld [vmem:[%s265] sm:$0xff]
        %v1570 = vld [vmem:[%s265 + $0x8] sm:$0xff]
        %v1571 = vld [vmem:[%s265 + $0x10] sm:$0x3]
        %v1572 = vld [vmem:[%s3] sm:$0xf]
        %v1573 = vld [vmem:[%s3 + $0x4] sm:$0xf]
        %v1574 = vld [vmem:[%s3 + $0x8] sm:$0xf]
        %v1575 = vld [vmem:[%s3 + $0xc] sm:$0xf]
        %v1576 = vld [vmem:[%s3 + $0x10] sm:$0xf]
        %v1577 = vld [vmem:[%s3 + $0x14] sm:$0xf]
        %v1578 = vld [vmem:[%s3 + $0x18] sm:$0xf]
        %v1579 = vld [vmem:[%s3 + $0x1c] sm:$0xf]
        %v1580 = vld [vmem:[%s3 + $0x20] sm:$0xf]
        %v1581 = vld [vmem:[%s3 + $0x24] sm:$0xf]
        %v1582 = vld [vmem:[%s3 + $0x28] sm:$0xf]
        %v1583 = vld [vmem:[%s3 + $0x2c] sm:$0xf]
        %v1584 = vld [vmem:[%s3 + $0x30] sm:$0xf]
        %v1585 = vld [vmem:[%s3 + $0x34] sm:$0xf]
        %v1586 = vld [vmem:[%s3 + $0x38] sm:$0xf]
        %v1587 = vld [vmem:[%s3 + $0x3c] sm:$0xf]
        %v1588 = vld [vmem:[%s3 + $0x40] sm:$0xf]
        %v1589 = vld [vmem:[%s3 + $0x44] sm:$0xf]
        %v1590 = vld [vmem:[%s3 + $0x48] sm:$0xf]
        %v1591 = vld [vmem:[%s3 + $0x4c] sm:$0xf]
        %v1592 = vld [vmem:[%s3 + $0x50] sm:$0xf]
        %v1593 = vld [vmem:[%s3 + $0x54] sm:$0xf]
        %v1594 = vld [vmem:[%s3 + $0x58] sm:$0xf]
        %v1595 = vld [vmem:[%s3 + $0x5c] sm:$0xf]
        %v1596 = vld [vmem:[%s3 + $0x60] sm:$0xf]
        %v1597 = vld [vmem:[%s3 + $0x64] sm:$0xf]
        %v1598 = vld [vmem:[%s3 + $0x68] sm:$0xf]
        %v1599 = vld [vmem:[%s3 + $0x6c] sm:$0xf]
        %v1600 = vld [vmem:[%s3 + $0x70] sm:$0xf]
        %v1601 = vld [vmem:[%s3 + $0x74] sm:$0xf]
        %v1602 = vld [vmem:[%s3 + $0x78] sm:$0xf]
        %v1603 = vld [vmem:[%s3 + $0x7c] sm:$0xf]
        %v1604 = vld [vmem:[%s3 + $0x80] sm:$0xf]
        %v1605 = vld [vmem:[%s3 + $0x84] sm:$0xf]
        %v1606 = vld [vmem:[%s3 + $0x88] sm:$0xf]
        %v1607 = vld [vmem:[%s3 + $0x8c] sm:$0xf]
        %v1608 = vld [vmem:[%s3 + $0x90] sm:$0xf]
        %v1609 = vld [vmem:[%s3 + $0x94] sm:$0xf]
        %v1610 = vld [vmem:[%s3 + $0x98] sm:$0xf]
        %v1611 = vld [vmem:[%s3 + $0x9c] sm:$0xf]
        %v1612 = vld [vmem:[%s3 + $0xa0] sm:$0xf]
        %v1613 = vld [vmem:[%s3 + $0xa4] sm:$0xf]
        %v1614 = vld [vmem:[%s3 + $0xa8] sm:$0xf]
        %v1615 = vld [vmem:[%s3 + $0xac] sm:$0xf]
        %v1616 = vld [vmem:[%s3 + $0xb0] sm:$0xf]
        %v1617 = vld [vmem:[%s3 + $0xb4] sm:$0xf]
        %v1618 = vld [vmem:[%s3 + $0xb8] sm:$0xf]
        %v1619 = vld [vmem:[%s3 + $0xbc] sm:$0xf]
        %v1620 = vld [vmem:[%s3 + $0xc0] sm:$0xf]
        %v1621 = vld [vmem:[%s3 + $0xc4] sm:$0xf]
        %v1622 = vld [vmem:[%s3 + $0xc8] sm:$0xf]
        %v1623 = vld [vmem:[%s3 + $0xcc] sm:$0xf]
        %v1624 = vld [vmem:[%s3 + $0xd0] sm:$0xf]
        %v1625 = vld [vmem:[%s3 + $0xd4] sm:$0xf]
        %v1626 = vld [vmem:[%s3 + $0xd8] sm:$0xf]
        %v1627 = vld [vmem:[%s3 + $0xdc] sm:$0xf]
        %v1628 = vld [vmem:[%s3 + $0xe0] sm:$0xf]
        %v1629 = vld [vmem:[%s3 + $0xe4] sm:$0xf]
        %v1630 = vld [vmem:[%s3 + $0xe8] sm:$0xf]
        %v1631 = vld [vmem:[%s3 + $0xec] sm:$0xf]
        %v1632 = vld [vmem:[%s3 + $0xf0] sm:$0xf]
        %v1633 = vld [vmem:[%s3 + $0xf4] sm:$0xf]
        %v1634 = vld [vmem:[%s3 + $0xf8] sm:$0xf]
        %v1635 = vld [vmem:[%s3 + $0xfc] sm:$0xf]
        %v1636 = vld [vmem:[%s3 + $0x100] sm:$0xf]
        %v1637 = vld [vmem:[%s3 + $0x104] sm:$0xf]
        %v1638 = vld [vmem:[%s3 + $0x108] sm:$0xf]
        %v1639 = vld [vmem:[%s3 + $0x10c] sm:$0xf]
        %v1640 = vld [vmem:[%s3 + $0x110] sm:$0xf]
        %v1641 = vld [vmem:[%s3 + $0x114] sm:$0xf]
        %v1642 = vld [vmem:[%s3 + $0x118] sm:$0xf]
        %v1643 = vld [vmem:[%s3 + $0x11c] sm:$0xf]
        %v1644 = vld [vmem:[%s3 + $0x120] sm:$0xf]
        %v1645 = vld [vmem:[%s3 + $0x124] sm:$0xf]
        %v1646 = vld [vmem:[%s3 + $0x128] sm:$0xf]
        %v1647 = vld [vmem:[%s3 + $0x12c] sm:$0xf]
        %v1648 = vld [vmem:[%s3 + $0x130] sm:$0xf]
        %v1649 = vld [vmem:[%s3 + $0x134] sm:$0xf]
        %v1650 = vld [vmem:[%s3 + $0x138] sm:$0xf]
        %v1651 = vld [vmem:[%s3 + $0x13c] sm:$0xf]
        %v1652 = vld [vmem:[%s3 + $0x140] sm:$0xf]
        %v1653 = vld [vmem:[%s3 + $0x144] sm:$0xf]
        %v1654 = vld [vmem:[%s3 + $0x148] sm:$0xf]
        %v1655 = vld [vmem:[%s3 + $0x14c] sm:$0xf]
        %v1656 = vld [vmem:[%s3 + $0x150] sm:$0xf]
        %v1657 = vld [vmem:[%s3 + $0x154] sm:$0xf]
        %v1658 = vld [vmem:[%s3 + $0x158] sm:$0xf]
        %v1659 = vld [vmem:[%s3 + $0x15c] sm:$0xf]
        %v1660 = vld [vmem:[%s3 + $0x160] sm:$0xf]
        %v1661 = vld [vmem:[%s3 + $0x164] sm:$0xf]
        %v1662 = vld [vmem:[%s3 + $0x168] sm:$0xf]
        %v1663 = vld [vmem:[%s3 + $0x16c] sm:$0xf]
        %v1664 = vld [vmem:[%s3 + $0x170] sm:$0xf]
        %v1665 = vld [vmem:[%s3 + $0x174] sm:$0xf]
        %v1666 = vld [vmem:[%s3 + $0x178] sm:$0xf]
        %v1667 = vld [vmem:[%s3 + $0x17c] sm:$0xf]
        %v1668 = vld [vmem:[%s3 + $0x180] sm:$0xf]
        %v1669 = vld [vmem:[%s3 + $0x184] sm:$0xf]
        %v1670 = vld [vmem:[%s3 + $0x188] sm:$0xf]
        %v1671 = vld [vmem:[%s3 + $0x18c] sm:$0xf]
        %v1672 = vld [vmem:[%s3 + $0x190] sm:$0xf]
        %v1673 = vld [vmem:[%s3 + $0x194] sm:$0xf]
        %v1674 = vld [vmem:[%s3 + $0x198] sm:$0xf]
        %v1675 = vld [vmem:[%s3 + $0x19c] sm:$0xf]
        %v1676 = vld [vmem:[%s3 + $0x1a0] sm:$0xf]
        %v1677 = vld [vmem:[%s3 + $0x1a4] sm:$0xf]
        %v1678 = vld [vmem:[%s3 + $0x1a8] sm:$0xf]
        %v1679 = vld [vmem:[%s3 + $0x1ac] sm:$0xf]
        %v1680 = vld [vmem:[%s3 + $0x1b0] sm:$0xf]
        %v1681 = vld [vmem:[%s3 + $0x1b4] sm:$0xf]
        %v1682 = vld [vmem:[%s3 + $0x1b8] sm:$0xf]
        %v1683 = vld [vmem:[%s3 + $0x1bc] sm:$0xf]
        %v1684 = vld [vmem:[%s3 + $0x1c0] sm:$0xf]
        %v1685 = vld [vmem:[%s3 + $0x1c4] sm:$0xf]
        %v1686 = vld [vmem:[%s3 + $0x1c8] sm:$0xf]
        %v1687 = vld [vmem:[%s3 + $0x1cc] sm:$0xf]
        %v1688 = vld [vmem:[%s3 + $0x1d0] sm:$0xf]
        %v1689 = vld [vmem:[%s3 + $0x1d4] sm:$0xf]
        %v1690 = vld [vmem:[%s3 + $0x1d8] sm:$0xf]
        %v1691 = vld [vmem:[%s3 + $0x1dc] sm:$0xf]
        %v1692 = vld [vmem:[%s3 + $0x1e0] sm:$0xf]
        %v1693 = vld [vmem:[%s3 + $0x1e4] sm:$0xf]
        %v1694 = vld [vmem:[%s3 + $0x1e8] sm:$0xf]
        %v1695 = vld [vmem:[%s3 + $0x1ec] sm:$0xf]
        %v1696 = vld [vmem:[%s3 + $0x1f0] sm:$0xf]
        %v1697 = vld [vmem:[%s3 + $0x1f4] sm:$0xf]
        %v1698 = vld [vmem:[%s3 + $0x1f8] sm:$0xf]
        %v1699 = vld [vmem:[%s3 + $0x1fc] sm:$0xf]
        %v1700 = vld [vmem:[%s3 + $0x200] sm:$0xf]
        %v1701 = vld [vmem:[%s3 + $0x204] sm:$0xf]
        %v1702 = vld [vmem:[%s3 + $0x208] sm:$0xf]
        %v1703 = vld [vmem:[%s3 + $0x20c] sm:$0xf]
        %v1704 = vld [vmem:[%s3 + $0x210] sm:$0xf]
        %v1705 = vld [vmem:[%s3 + $0x214] sm:$0xf]
        %v1706 = vld [vmem:[%s3 + $0x218] sm:$0xf]
        %v1707 = vld [vmem:[%s3 + $0x21c] sm:$0xf]
        %v1708 = vld [vmem:[%s3 + $0x220] sm:$0xf]
        %v1709 = vld [vmem:[%s3 + $0x224] sm:$0xf]
        %v1710 = vld [vmem:[%s3 + $0x228] sm:$0xf]
        %v1711 = vld [vmem:[%s3 + $0x22c] sm:$0xf]
        %v1712 = vld [vmem:[%s3 + $0x230] sm:$0xf]
        %v1713 = vld [vmem:[%s3 + $0x234] sm:$0xf]
        %v1714 = vld [vmem:[%s3 + $0x238] sm:$0xf]
        %v1715 = vld [vmem:[%s3 + $0x23c] sm:$0xf]
        %v1716 = vld [vmem:[%s3 + $0x240] sm:$0xf]
        %v1717 = vld [vmem:[%s3 + $0x244] sm:$0xf]
        %v1718 = vld [vmem:[%s3 + $0x248] sm:$0xf]
        %v1719 = vld [vmem:[%s3 + $0x24c] sm:$0xf]
        %v1720 = vld [vmem:[%s3 + $0x250] sm:$0xf]
        %v1721 = vld [vmem:[%s3 + $0x254] sm:$0xf]
        %v1722 = vld [vmem:[%s3 + $0x258] sm:$0xf]
        %v1723 = vld [vmem:[%s3 + $0x25c] sm:$0xf]
        %v1724 = vld [vmem:[%s3 + $0x260] sm:$0xf]
        %v1725 = vld [vmem:[%s3 + $0x264] sm:$0xf]
        %v1726 = vld [vmem:[%s3 + $0x268] sm:$0xf]
        %v1727 = vld [vmem:[%s3 + $0x26c] sm:$0xf]
        %v1728 = vld [vmem:[%s3 + $0x270] sm:$0xf]
        %v1729 = vld [vmem:[%s3 + $0x274] sm:$0xf]
        %v1730 = vld [vmem:[%s3 + $0x278] sm:$0xf]
        %v1731 = vld [vmem:[%s3 + $0x27c] sm:$0xf]
        %v1732 = vld [vmem:[%s3 + $0x280] sm:$0xf]
        %v1733 = vld [vmem:[%s3 + $0x284] sm:$0xf]
        %v1734 = vld [vmem:[%s3 + $0x288] sm:$0xf]
        %v1735 = vld [vmem:[%s3 + $0x28c] sm:$0xf]
        %v1736 = vld [vmem:[%s3 + $0x290] sm:$0xf]
        %v1737 = vld [vmem:[%s3 + $0x294] sm:$0xf]
        %v1738 = vld [vmem:[%s3 + $0x298] sm:$0xf]
        %v1739 = vld [vmem:[%s3 + $0x29c] sm:$0xf]
        %v1740 = vld [vmem:[%s3 + $0x2a0] sm:$0xf]
        %v1741 = vld [vmem:[%s3 + $0x2a4] sm:$0xf]
        %v1742 = vld [vmem:[%s3 + $0x2a8] sm:$0xf]
        %v1743 = vld [vmem:[%s3 + $0x2ac] sm:$0xf]
        %v1744 = vld [vmem:[%s3 + $0x2b0] sm:$0xf]
        %v1745 = vld [vmem:[%s3 + $0x2b4] sm:$0xf]
        %v1746 = vld [vmem:[%s3 + $0x2b8] sm:$0xf]
        %v1747 = vld [vmem:[%s3 + $0x2bc] sm:$0xf]
        %v1748 = vld [vmem:[%s3 + $0x2c0] sm:$0xf]
        %v1749 = vld [vmem:[%s3 + $0x2c4] sm:$0xf]
        %v1750 = vld [vmem:[%s3 + $0x2c8] sm:$0xf]
        %v1751 = vld [vmem:[%s3 + $0x2cc] sm:$0xf]
        %v1752 = vld [vmem:[%s3 + $0x2d0] sm:$0xf]
        %v1753 = vld [vmem:[%s3 + $0x2d4] sm:$0xf]
        %v1754 = vld [vmem:[%s3 + $0x2d8] sm:$0xf]
        %v1755 = vld [vmem:[%s3 + $0x2dc] sm:$0xf]
        %v1756 = vld [vmem:[%s3 + $0x2e0] sm:$0xf]
        %v1757 = vld [vmem:[%s3 + $0x2e4] sm:$0xf]
        %v1758 = vld [vmem:[%s3 + $0x2e8] sm:$0xf]
        %v1759 = vld [vmem:[%s3 + $0x2ec] sm:$0xf]
        %v1760 = vld [vmem:[%s3 + $0x2f0] sm:$0xf]
        %v1761 = vld [vmem:[%s3 + $0x2f4] sm:$0xf]
        %v1762 = vld [vmem:[%s3 + $0x2f8] sm:$0xf]
        %v1763 = vld [vmem:[%s3 + $0x2fc] sm:$0xf]
        %v1764 = vld [vmem:[%s3 + $0x300] sm:$0xf]
        %v1765 = vld [vmem:[%s3 + $0x304] sm:$0xf]
        %v1766 = vld [vmem:[%s3 + $0x308] sm:$0xf]
        %v1767 = vld [vmem:[%s3 + $0x30c] sm:$0xf]
        %v1768 = vld [vmem:[%s3 + $0x310] sm:$0xf]
        %v1769 = vld [vmem:[%s3 + $0x314] sm:$0xf]
        %v1770 = vld [vmem:[%s3 + $0x318] sm:$0xf]
        %v1771 = vld [vmem:[%s3 + $0x31c] sm:$0xf]
        %v1772 = vld [vmem:[%s3 + $0x320] sm:$0xf]
        %v1773 = vld [vmem:[%s3 + $0x324] sm:$0xf]
        %v1774 = vld [vmem:[%s3 + $0x328] sm:$0xf]
        %v1775 = vld [vmem:[%s3 + $0x32c] sm:$0xf]
        %v1776 = vld [vmem:[%s3 + $0x330] sm:$0xf]
        %v1777 = vld [vmem:[%s3 + $0x334] sm:$0xf]
        %v1778 = vld [vmem:[%s3 + $0x338] sm:$0xf]
        %v1779 = vld [vmem:[%s3 + $0x33c] sm:$0xf]
        %v1780 = vld [vmem:[%s3 + $0x340] sm:$0xf]
        %v1781 = vld [vmem:[%s3 + $0x344] sm:$0xf]
        %v1782 = vld [vmem:[%s3 + $0x348] sm:$0xf]
        %v1783 = vld [vmem:[%s3 + $0x34c] sm:$0xf]
        %v1784 = vld [vmem:[%s3 + $0x350] sm:$0xf]
        %v1785 = vld [vmem:[%s3 + $0x354] sm:$0xf]
        %v1786 = vld [vmem:[%s3 + $0x358] sm:$0xf]
        %v1787 = vld [vmem:[%s3 + $0x35c] sm:$0xf]
        %v1788 = vld [vmem:[%s3 + $0x360] sm:$0xf]
        %v1789 = vld [vmem:[%s3 + $0x364] sm:$0xf]
        %v1790 = vld [vmem:[%s3 + $0x368] sm:$0xf]
        %v1791 = vld [vmem:[%s3 + $0x36c] sm:$0xf]
        %v1792 = vld [vmem:[%s3 + $0x370] sm:$0xf]
        %v1793 = vld [vmem:[%s3 + $0x374] sm:$0xf]
        %v1794 = vld [vmem:[%s3 + $0x378] sm:$0xf]
        %v1795 = vld [vmem:[%s3 + $0x37c] sm:$0xf]
        %v1796 = vld [vmem:[%s3 + $0x380] sm:$0xf]
        %v1797 = vld [vmem:[%s3 + $0x384] sm:$0xf]
        %v1798 = vld [vmem:[%s3 + $0x388] sm:$0xf]
        %v1799 = vld [vmem:[%s3 + $0x38c] sm:$0xf]
        %v1800 = vld [vmem:[%s3 + $0x390] sm:$0xf]
        %v1801 = vld [vmem:[%s3 + $0x394] sm:$0xf]
        %v1802 = vld [vmem:[%s3 + $0x398] sm:$0xf]
        %v1803 = vld [vmem:[%s3 + $0x39c] sm:$0xf]
        %v1804 = vld [vmem:[%s3 + $0x3a0] sm:$0xf]
        %v1805 = vld [vmem:[%s3 + $0x3a4] sm:$0xf]
        %v1806 = vld [vmem:[%s3 + $0x3a8] sm:$0xf]
        %v1807 = vld [vmem:[%s3 + $0x3ac] sm:$0xf]
        %v1808 = vld [vmem:[%s3 + $0x3b0] sm:$0xf]
        %v1809 = vld [vmem:[%s3 + $0x3b4] sm:$0xf]
        %v1810 = vld [vmem:[%s3 + $0x3b8] sm:$0xf]
        %v1811 = vld [vmem:[%s3 + $0x3bc] sm:$0xf]
        %v1812 = vld [vmem:[%s3 + $0x3c0] sm:$0xf]
        %v1813 = vld [vmem:[%s3 + $0x3c4] sm:$0xf]
        %v1814 = vld [vmem:[%s3 + $0x3c8] sm:$0xf]
        %v1815 = vld [vmem:[%s3 + $0x3cc] sm:$0xf]
        %v1816 = vld [vmem:[%s3 + $0x3d0] sm:$0xf]
        %v1817 = vld [vmem:[%s3 + $0x3d4] sm:$0xf]
        %v1818 = vld [vmem:[%s3 + $0x3d8] sm:$0xf]
        %v1819 = vld [vmem:[%s3 + $0x3dc] sm:$0xf]
        %v1820 = vld [vmem:[%s3 + $0x3e0] sm:$0xf]
        %v1821 = vld [vmem:[%s3 + $0x3e4] sm:$0xf]
        %v1822 = vld [vmem:[%s3 + $0x3e8] sm:$0xf]
        %v1823 = vld [vmem:[%s3 + $0x3ec] sm:$0xf]
        %v1824 = vld [vmem:[%s3 + $0x3f0] sm:$0xf]
        %v1825 = vld [vmem:[%s3 + $0x3f4] sm:$0xf]
        %v1826 = vld [vmem:[%s3 + $0x3f8] sm:$0xf]
        %v1827 = vld [vmem:[%s3 + $0x3fc] sm:$0xf]
        %v1828 = vld [vmem:[%s3 + $0x400] sm:$0xf]
        %v1829 = vld [vmem:[%s3 + $0x404] sm:$0xf]
        %v1830 = vld [vmem:[%s3 + $0x408] sm:$0xf]
        %v1831 = vld [vmem:[%s3 + $0x40c] sm:$0xf]
        %v1832 = vld [vmem:[%s3 + $0x410] sm:$0xf]
        %v1833 = vld [vmem:[%s3 + $0x414] sm:$0xf]
        %v1834 = vld [vmem:[%s3 + $0x418] sm:$0xf]
        %v1835 = vld [vmem:[%s3 + $0x41c] sm:$0xf]
        %v1836 = vld [vmem:[%s3 + $0x420] sm:$0xf]
        %v1837 = vld [vmem:[%s3 + $0x424] sm:$0xf]
        %v1838 = vld [vmem:[%s3 + $0x428] sm:$0xf]
        %v1839 = vld [vmem:[%s3 + $0x42c] sm:$0xf]
        %v1840 = vld [vmem:[%s3 + $0x430] sm:$0xf]
        %v1841 = vld [vmem:[%s3 + $0x434] sm:$0xf]
        %v1842 = vld [vmem:[%s3 + $0x438] sm:$0xf]
        %v1843 = vld [vmem:[%s3 + $0x43c] sm:$0xf]
        %v1844 = vld [vmem:[%s3 + $0x440] sm:$0xf]
        %v1845 = vld [vmem:[%s3 + $0x444] sm:$0xf]
        %v1846 = vld [vmem:[%s3 + $0x448] sm:$0xf]
        %v1847 = vld [vmem:[%s3 + $0x44c] sm:$0xf]
        %v1848 = vld [vmem:[%s3 + $0x450] sm:$0xf]
        %v1849 = vld [vmem:[%s3 + $0x454] sm:$0xf]
        %v1850 = vld [vmem:[%s3 + $0x458] sm:$0xf]
        %v1851 = vld [vmem:[%s3 + $0x45c] sm:$0xf]
        %v1852 = vld [vmem:[%s3 + $0x460] sm:$0xf]
        %v1853 = vld [vmem:[%s3 + $0x464] sm:$0xf]
        %v1854 = vld [vmem:[%s3 + $0x468] sm:$0xf]
        %v1855 = vld [vmem:[%s3 + $0x46c] sm:$0xf]
        %v1856 = vld [vmem:[%s3 + $0x470] sm:$0xf]
        %v1857 = vld [vmem:[%s3 + $0x474] sm:$0xf]
        %v1858 = vld [vmem:[%s3 + $0x478] sm:$0xf]
        %v1859 = vld [vmem:[%s3 + $0x47c] sm:$0xf]
        %1861 = vst [vmem:[#allocation1] ss:$9 sm:$0xff] %v1569
        %v1862 = vld [vmem:[#allocation1] sm:$0xff]
        %v1863 = vld [vmem:[#allocation1 + $0x9] sm:$0xff]
        %v1864 = vld [vmem:[#allocation1 + $0x12] sm:$0xff]
        %v1865 = vld [vmem:[#allocation1 + $0x1b] sm:$0xff]
        %v1866 = vld [vmem:[#allocation1 + $0x24] sm:$0xff]
        %v1867 = vld [vmem:[#allocation1 + $0x2d] sm:$0xff]
        %v1868 = vld [vmem:[#allocation1 + $0x36] sm:$0xff]
        %v1869 = vld [vmem:[#allocation1 + $0x3f] sm:$0xff]
        %1871 = vst [vmem:[#allocation1] ss:$9 sm:$0xff] %v1570
        %v1872 = vld [vmem:[#allocation1] sm:$0xff]
        %v1873 = vld [vmem:[#allocation1 + $0x9] sm:$0xff]
        %v1874 = vld [vmem:[#allocation1 + $0x12] sm:$0xff]
        %v1875 = vld [vmem:[#allocation1 + $0x1b] sm:$0xff]
        %v1876 = vld [vmem:[#allocation1 + $0x24] sm:$0xff]
        %v1877 = vld [vmem:[#allocation1 + $0x2d] sm:$0xff]
        %v1878 = vld [vmem:[#allocation1 + $0x36] sm:$0xff]
        %v1879 = vld [vmem:[#allocation1 + $0x3f] sm:$0xff]
        %1881 = vst [vmem:[#allocation1] ss:$9 sm:$0xff] %v1571
        %v1882 = vld [vmem:[#allocation1] sm:$0xff]
        %v1883 = vld [vmem:[#allocation1 + $0x9] sm:$0xff]
        %v2190 = vunpack.c.l.b16 %v1572
        %v2191 = vunpack.c.l.b16 %v1573
        %v2192 = vunpack.c.l.b16 %v1574
        %v2193 = vunpack.c.l.b16 %v1575
        %v2194 = vunpack.c.l.b16 %v1576
        %v2195 = vunpack.c.l.b16 %v1577
        %v2196 = vunpack.c.l.b16 %v1578
        %v2197 = vunpack.c.l.b16 %v1579
        %v2198 = vunpack.c.l.b16 %v1580
        %v2199 = vunpack.c.l.b16 %v1581
        %v2200 = vunpack.c.l.b16 %v1582
        %v2201 = vunpack.c.l.b16 %v1583
        %v2202 = vunpack.c.l.b16 %v1584
        %v2203 = vunpack.c.l.b16 %v1585
        %v2204 = vunpack.c.l.b16 %v1586
        %v2205 = vunpack.c.l.b16 %v1587
        %v2206 = vunpack.c.l.b16 %v1588
        %v2207 = vunpack.c.l.b16 %v1589
        %v2208 = vunpack.c.l.b16 %v1590
        %v2209 = vunpack.c.l.b16 %v1591
        %v2210 = vunpack.c.l.b16 %v1592
        %v2211 = vunpack.c.l.b16 %v1593
        %v2212 = vunpack.c.l.b16 %v1594
        %v2213 = vunpack.c.l.b16 %v1595
        %v2214 = vunpack.c.l.b16 %v1596
        %v2215 = vunpack.c.l.b16 %v1597
        %v2216 = vunpack.c.l.b16 %v1598
        %v2217 = vunpack.c.l.b16 %v1599
        %v2218 = vunpack.c.l.b16 %v1600
        %v2219 = vunpack.c.l.b16 %v1601
        %v2220 = vunpack.c.l.b16 %v1602
        %v2221 = vunpack.c.l.b16 %v1603
        %v2222 = vunpack.c.l.b16 %v1604
        %v2223 = vunpack.c.l.b16 %v1605
        %v2224 = vunpack.c.l.b16 %v1606
        %v2225 = vunpack.c.l.b16 %v1607
        %v2226 = vunpack.c.l.b16 %v1608
        %v2227 = vunpack.c.l.b16 %v1609
        %v2228 = vunpack.c.l.b16 %v1610
        %v2229 = vunpack.c.l.b16 %v1611
        %v2230 = vunpack.c.l.b16 %v1612
        %v2231 = vunpack.c.l.b16 %v1613
        %v2232 = vunpack.c.l.b16 %v1614
        %v2233 = vunpack.c.l.b16 %v1615
        %v2234 = vunpack.c.l.b16 %v1616
        %v2235 = vunpack.c.l.b16 %v1617
        %v2236 = vunpack.c.l.b16 %v1618
        %v2237 = vunpack.c.l.b16 %v1619
        %v2238 = vunpack.c.l.b16 %v1620
        %v2239 = vunpack.c.l.b16 %v1621
        %v2240 = vunpack.c.l.b16 %v1622
        %v2241 = vunpack.c.l.b16 %v1623
        %v2242 = vunpack.c.l.b16 %v1624
        %v2243 = vunpack.c.l.b16 %v1625
        %v2244 = vunpack.c.l.b16 %v1626
        %v2245 = vunpack.c.l.b16 %v1627
        %v2246 = vunpack.c.l.b16 %v1628
        %v2247 = vunpack.c.l.b16 %v1629
        %v2248 = vunpack.c.l.b16 %v1630
        %v2249 = vunpack.c.l.b16 %v1631
        %v2250 = vunpack.c.l.b16 %v1632
        %v2251 = vunpack.c.l.b16 %v1633
        %v2252 = vunpack.c.l.b16 %v1634
        %v2253 = vunpack.c.l.b16 %v1635
        %v2254 = vunpack.c.l.b16 %v1636
        %v2255 = vunpack.c.l.b16 %v1637
        %v2256 = vunpack.c.l.b16 %v1638
        %v2257 = vunpack.c.l.b16 %v1639
        %v2258 = vunpack.c.l.b16 %v1640
        %v2259 = vunpack.c.l.b16 %v1641
        %v2260 = vunpack.c.l.b16 %v1642
        %v2261 = vunpack.c.l.b16 %v1643
        %v2262 = vunpack.c.l.b16 %v1644
        %v2263 = vunpack.c.l.b16 %v1645
        %v2264 = vunpack.c.l.b16 %v1646
        %v2265 = vunpack.c.l.b16 %v1647
        %v2266 = vunpack.c.l.b16 %v1648
        %v2267 = vunpack.c.l.b16 %v1649
        %v2268 = vunpack.c.l.b16 %v1650
        %v2269 = vunpack.c.l.b16 %v1651
        %v2270 = vunpack.c.l.b16 %v1652
        %v2271 = vunpack.c.l.b16 %v1653
        %v2272 = vunpack.c.l.b16 %v1654
        %v2273 = vunpack.c.l.b16 %v1655
        %v2274 = vunpack.c.l.b16 %v1656
        %v2275 = vunpack.c.l.b16 %v1657
        %v2276 = vunpack.c.l.b16 %v1658
        %v2277 = vunpack.c.l.b16 %v1659
        %v2278 = vunpack.c.l.b16 %v1660
        %v2279 = vunpack.c.l.b16 %v1661
        %v2280 = vunpack.c.l.b16 %v1662
        %v2281 = vunpack.c.l.b16 %v1663
        %v2282 = vunpack.c.l.b16 %v1664
        %v2283 = vunpack.c.l.b16 %v1665
        %v2284 = vunpack.c.l.b16 %v1666
        %v2285 = vunpack.c.l.b16 %v1667
        %v2286 = vunpack.c.l.b16 %v1668
        %v2287 = vunpack.c.l.b16 %v1669
        %v2288 = vunpack.c.l.b16 %v1670
        %v2289 = vunpack.c.l.b16 %v1671
        %v2290 = vunpack.c.l.b16 %v1672
        %v2291 = vunpack.c.l.b16 %v1673
        %v2292 = vunpack.c.l.b16 %v1674
        %v2293 = vunpack.c.l.b16 %v1675
        %v2294 = vunpack.c.l.b16 %v1676
        %v2295 = vunpack.c.l.b16 %v1677
        %v2296 = vunpack.c.l.b16 %v1678
        %v2297 = vunpack.c.l.b16 %v1679
        %v2298 = vunpack.c.l.b16 %v1680
        %v2299 = vunpack.c.l.b16 %v1681
        %v2300 = vunpack.c.l.b16 %v1682
        %v2301 = vunpack.c.l.b16 %v1683
        %v2302 = vunpack.c.l.b16 %v1684
        %v2303 = vunpack.c.l.b16 %v1685
        %v2304 = vunpack.c.l.b16 %v1686
        %v2305 = vunpack.c.l.b16 %v1687
        %v2306 = vunpack.c.l.b16 %v1688
        %v2307 = vunpack.c.l.b16 %v1689
        %v2308 = vunpack.c.l.b16 %v1690
        %v2309 = vunpack.c.l.b16 %v1691
        %v2310 = vunpack.c.l.b16 %v1692
        %v2311 = vunpack.c.l.b16 %v1693
        %v2312 = vunpack.c.l.b16 %v1694
        %v2313 = vunpack.c.l.b16 %v1695
        %v2314 = vunpack.c.l.b16 %v1696
        %v2315 = vunpack.c.l.b16 %v1697
        %v2316 = vunpack.c.l.b16 %v1698
        %v2317 = vunpack.c.l.b16 %v1699
        %v2318 = vunpack.c.l.b16 %v1700
        %v2319 = vunpack.c.l.b16 %v1701
        %v2320 = vunpack.c.l.b16 %v1702
        %v2321 = vunpack.c.l.b16 %v1703
        %v2322 = vunpack.c.l.b16 %v1704
        %v2323 = vunpack.c.l.b16 %v1705
        %v2324 = vunpack.c.l.b16 %v1706
        %v2325 = vunpack.c.l.b16 %v1707
        %v2326 = vunpack.c.l.b16 %v1708
        %v2327 = vunpack.c.l.b16 %v1709
        %v2328 = vunpack.c.l.b16 %v1710
        %v2329 = vunpack.c.l.b16 %v1711
        %v2330 = vunpack.c.l.b16 %v1712
        %v2331 = vunpack.c.l.b16 %v1713
        %v2332 = vunpack.c.l.b16 %v1714
        %v2333 = vunpack.c.l.b16 %v1715
        %v2334 = vunpack.c.l.b16 %v1716
        %v2335 = vunpack.c.l.b16 %v1717
        %v2336 = vunpack.c.l.b16 %v1718
        %v2337 = vunpack.c.l.b16 %v1719
        %v2338 = vunpack.c.l.b16 %v1720
        %v2339 = vunpack.c.l.b16 %v1721
        %v2340 = vunpack.c.l.b16 %v1722
        %v2341 = vunpack.c.l.b16 %v1723
        %v2342 = vunpack.c.l.b16 %v1724
        %v2343 = vunpack.c.l.b16 %v1725
        %v2344 = vunpack.c.l.b16 %v1726
        %v2345 = vunpack.c.l.b16 %v1727
        %v2346 = vunpack.c.l.b16 %v1728
        %v2347 = vunpack.c.l.b16 %v1729
        %v2348 = vunpack.c.l.b16 %v1730
        %v2349 = vunpack.c.l.b16 %v1731
        %v2350 = vunpack.c.l.b16 %v1732
        %v2351 = vunpack.c.l.b16 %v1733
        %v2352 = vunpack.c.l.b16 %v1734
        %v2353 = vunpack.c.l.b16 %v1735
        %v2354 = vunpack.c.l.b16 %v1736
        %v2355 = vunpack.c.l.b16 %v1737
        %v2356 = vunpack.c.l.b16 %v1738
        %v2357 = vunpack.c.l.b16 %v1739
        %v2358 = vunpack.c.l.b16 %v1740
        %v2359 = vunpack.c.l.b16 %v1741
        %v2360 = vunpack.c.l.b16 %v1742
        %v2361 = vunpack.c.l.b16 %v1743
        %v2362 = vunpack.c.l.b16 %v1744
        %v2363 = vunpack.c.l.b16 %v1745
        %v2364 = vunpack.c.l.b16 %v1746
        %v2365 = vunpack.c.l.b16 %v1747
        %v2366 = vunpack.c.l.b16 %v1748
        %v2367 = vunpack.c.l.b16 %v1749
        %v2368 = vunpack.c.l.b16 %v1750
        %v2369 = vunpack.c.l.b16 %v1751
        %v2370 = vunpack.c.l.b16 %v1752
        %v2371 = vunpack.c.l.b16 %v1753
        %v2372 = vunpack.c.l.b16 %v1754
        %v2373 = vunpack.c.l.b16 %v1755
        %v2374 = vunpack.c.l.b16 %v1756
        %v2375 = vunpack.c.l.b16 %v1757
        %v2376 = vunpack.c.l.b16 %v1758
        %v2377 = vunpack.c.l.b16 %v1759
        %v2378 = vunpack.c.l.b16 %v1760
        %v2379 = vunpack.c.l.b16 %v1761
        %v2380 = vunpack.c.l.b16 %v1762
        %v2381 = vunpack.c.l.b16 %v1763
        %v2382 = vunpack.c.l.b16 %v1764
        %v2383 = vunpack.c.l.b16 %v1765
        %v2384 = vunpack.c.l.b16 %v1766
        %v2385 = vunpack.c.l.b16 %v1767
        %v2386 = vunpack.c.l.b16 %v1768
        %v2387 = vunpack.c.l.b16 %v1769
        %v2388 = vunpack.c.l.b16 %v1770
        %v2389 = vunpack.c.l.b16 %v1771
        %v2390 = vunpack.c.l.b16 %v1772
        %v2391 = vunpack.c.l.b16 %v1773
        %v2392 = vunpack.c.l.b16 %v1774
        %v2393 = vunpack.c.l.b16 %v1775
        %v2394 = vunpack.c.l.b16 %v1776
        %v2395 = vunpack.c.l.b16 %v1777
        %v2396 = vunpack.c.l.b16 %v1778
        %v2397 = vunpack.c.l.b16 %v1779
        %v2398 = vunpack.c.l.b16 %v1780
        %v2399 = vunpack.c.l.b16 %v1781
        %v2400 = vunpack.c.l.b16 %v1782
        %v2401 = vunpack.c.l.b16 %v1783
        %v2402 = vunpack.c.l.b16 %v1784
        %v2403 = vunpack.c.l.b16 %v1785
        %v2404 = vunpack.c.l.b16 %v1786
        %v2405 = vunpack.c.l.b16 %v1787
        %v2406 = vunpack.c.l.b16 %v1788
        %v2407 = vunpack.c.l.b16 %v1789
        %v2408 = vunpack.c.l.b16 %v1790
        %v2409 = vunpack.c.l.b16 %v1791
        %v2410 = vunpack.c.l.b16 %v1792
        %v2411 = vunpack.c.l.b16 %v1793
        %v2412 = vunpack.c.l.b16 %v1794
        %v2413 = vunpack.c.l.b16 %v1795
        %v2414 = vunpack.c.l.b16 %v1796
        %v2415 = vunpack.c.l.b16 %v1797
        %v2416 = vunpack.c.l.b16 %v1798
        %v2417 = vunpack.c.l.b16 %v1799
        %v2418 = vunpack.c.l.b16 %v1800
        %v2419 = vunpack.c.l.b16 %v1801
        %v2420 = vunpack.c.l.b16 %v1802
        %v2421 = vunpack.c.l.b16 %v1803
        %v2422 = vunpack.c.l.b16 %v1804
        %v2423 = vunpack.c.l.b16 %v1805
        %v2424 = vunpack.c.l.b16 %v1806
        %v2425 = vunpack.c.l.b16 %v1807
        %v2426 = vunpack.c.l.b16 %v1808
        %v2427 = vunpack.c.l.b16 %v1809
        %v2428 = vunpack.c.l.b16 %v1810
        %v2429 = vunpack.c.l.b16 %v1811
        %v2430 = vunpack.c.l.b16 %v1812
        %v2431 = vunpack.c.l.b16 %v1813
        %v2432 = vunpack.c.l.b16 %v1814
        %v2433 = vunpack.c.l.b16 %v1815
        %v2434 = vunpack.c.l.b16 %v1816
        %v2435 = vunpack.c.l.b16 %v1817
        %v2436 = vunpack.c.l.b16 %v1818
        %v2437 = vunpack.c.l.b16 %v1819
        %v2438 = vunpack.c.l.b16 %v1820
        %v2439 = vunpack.c.l.b16 %v1821
        %v2440 = vunpack.c.l.b16 %v1822
        %v2441 = vunpack.c.l.b16 %v1823
        %v2442 = vunpack.c.l.b16 %v1824
        %v2443 = vunpack.c.l.b16 %v1825
        %v2444 = vunpack.c.l.b16 %v1826
        %v2445 = vunpack.c.l.b16 %v1827
        %v2446 = vunpack.c.l.b16 %v1828
        %v2447 = vunpack.c.l.b16 %v1829
        %v2448 = vunpack.c.l.b16 %v1830
        %v2449 = vunpack.c.l.b16 %v1831
        %v2450 = vunpack.c.l.b16 %v1832
        %v2451 = vunpack.c.l.b16 %v1833
        %v2452 = vunpack.c.l.b16 %v1834
        %v2453 = vunpack.c.l.b16 %v1835
        %v2454 = vunpack.c.l.b16 %v1836
        %v2455 = vunpack.c.l.b16 %v1837
        %v2456 = vunpack.c.l.b16 %v1838
        %v2457 = vunpack.c.l.b16 %v1839
        %v2458 = vunpack.c.l.b16 %v1840
        %v2459 = vunpack.c.l.b16 %v1841
        %v2460 = vunpack.c.l.b16 %v1842
        %v2461 = vunpack.c.l.b16 %v1843
        %v2462 = vunpack.c.l.b16 %v1844
        %v2463 = vunpack.c.l.b16 %v1845
        %v2464 = vunpack.c.l.b16 %v1846
        %v2465 = vunpack.c.l.b16 %v1847
        %v2466 = vunpack.c.l.b16 %v1848
        %v2467 = vunpack.c.l.b16 %v1849
        %v2468 = vunpack.c.l.b16 %v1850
        %v2469 = vunpack.c.l.b16 %v1851
        %v2470 = vunpack.c.l.b16 %v1852
        %v2471 = vunpack.c.l.b16 %v1853
        %v2472 = vunpack.c.l.b16 %v1854
        %v2473 = vunpack.c.l.b16 %v1855
        %v2474 = vunpack.c.l.b16 %v1856
        %v2475 = vunpack.c.l.b16 %v1857
        %v2476 = vunpack.c.l.b16 %v1858
        %v2477 = vunpack.c.l.b16 %v1859
        %v2478 = vpack.c.b16 %v2191, %v2190
        %v2479 = vpack.c.b16 %v2193, %v2192
        %v2480 = vpack.c.b16 %v2195, %v2194
        %v2481 = vpack.c.b16 %v2197, %v2196
        %v2482 = vpack.c.b16 %v2199, %v2198
        %v2483 = vpack.c.b16 %v2201, %v2200
        %v2484 = vpack.c.b16 %v2203, %v2202
        %v2485 = vpack.c.b16 %v2205, %v2204
        %v2486 = vpack.c.b16 %v2207, %v2206
        %v2487 = vpack.c.b16 %v2209, %v2208
        %v2488 = vpack.c.b16 %v2211, %v2210
        %v2489 = vpack.c.b16 %v2213, %v2212
        %v2490 = vpack.c.b16 %v2215, %v2214
        %v2491 = vpack.c.b16 %v2217, %v2216
        %v2492 = vpack.c.b16 %v2219, %v2218
        %v2493 = vpack.c.b16 %v2221, %v2220
        %v2494 = vpack.c.b16 %v2223, %v2222
        %v2495 = vpack.c.b16 %v2225, %v2224
        %v2496 = vpack.c.b16 %v2227, %v2226
        %v2497 = vpack.c.b16 %v2229, %v2228
        %v2498 = vpack.c.b16 %v2231, %v2230
        %v2499 = vpack.c.b16 %v2233, %v2232
        %v2500 = vpack.c.b16 %v2235, %v2234
        %v2501 = vpack.c.b16 %v2237, %v2236
        %v2502 = vpack.c.b16 %v2239, %v2238
        %v2503 = vpack.c.b16 %v2241, %v2240
        %v2504 = vpack.c.b16 %v2243, %v2242
        %v2505 = vpack.c.b16 %v2245, %v2244
        %v2506 = vpack.c.b16 %v2247, %v2246
        %v2507 = vpack.c.b16 %v2249, %v2248
        %v2508 = vpack.c.b16 %v2251, %v2250
        %v2509 = vpack.c.b16 %v2253, %v2252
        %v2510 = vpack.c.b16 %v2255, %v2254
        %v2511 = vpack.c.b16 %v2257, %v2256
        %v2512 = vpack.c.b16 %v2259, %v2258
        %v2513 = vpack.c.b16 %v2261, %v2260
        %v2514 = vpack.c.b16 %v2263, %v2262
        %v2515 = vpack.c.b16 %v2265, %v2264
        %v2516 = vpack.c.b16 %v2267, %v2266
        %v2517 = vpack.c.b16 %v2269, %v2268
        %v2518 = vpack.c.b16 %v2271, %v2270
        %v2519 = vpack.c.b16 %v2273, %v2272
        %v2520 = vpack.c.b16 %v2275, %v2274
        %v2521 = vpack.c.b16 %v2277, %v2276
        %v2522 = vpack.c.b16 %v2279, %v2278
        %v2523 = vpack.c.b16 %v2281, %v2280
        %v2524 = vpack.c.b16 %v2283, %v2282
        %v2525 = vpack.c.b16 %v2285, %v2284
        %v2526 = vpack.c.b16 %v2287, %v2286
        %v2527 = vpack.c.b16 %v2289, %v2288
        %v2528 = vpack.c.b16 %v2291, %v2290
        %v2529 = vpack.c.b16 %v2293, %v2292
        %v2530 = vpack.c.b16 %v2295, %v2294
        %v2531 = vpack.c.b16 %v2297, %v2296
        %v2532 = vpack.c.b16 %v2299, %v2298
        %v2533 = vpack.c.b16 %v2301, %v2300
        %v2534 = vpack.c.b16 %v2303, %v2302
        %v2535 = vpack.c.b16 %v2305, %v2304
        %v2536 = vpack.c.b16 %v2307, %v2306
        %v2537 = vpack.c.b16 %v2309, %v2308
        %v2538 = vpack.c.b16 %v2311, %v2310
        %v2539 = vpack.c.b16 %v2313, %v2312
        %v2540 = vpack.c.b16 %v2315, %v2314
        %v2541 = vpack.c.b16 %v2317, %v2316
        %v2542 = vpack.c.b16 %v2319, %v2318
        %v2543 = vpack.c.b16 %v2321, %v2320
        %v2544 = vpack.c.b16 %v2323, %v2322
        %v2545 = vpack.c.b16 %v2325, %v2324
        %v2546 = vpack.c.b16 %v2327, %v2326
        %v2547 = vpack.c.b16 %v2329, %v2328
        %v2548 = vpack.c.b16 %v2331, %v2330
        %v2549 = vpack.c.b16 %v2333, %v2332
        %v2550 = vpack.c.b16 %v2335, %v2334
        %v2551 = vpack.c.b16 %v2337, %v2336
        %v2552 = vpack.c.b16 %v2339, %v2338
        %v2553 = vpack.c.b16 %v2341, %v2340
        %v2554 = vpack.c.b16 %v2343, %v2342
        %v2555 = vpack.c.b16 %v2345, %v2344
        %v2556 = vpack.c.b16 %v2347, %v2346
        %v2557 = vpack.c.b16 %v2349, %v2348
        %v2558 = vpack.c.b16 %v2351, %v2350
        %v2559 = vpack.c.b16 %v2353, %v2352
        %v2560 = vpack.c.b16 %v2355, %v2354
        %v2561 = vpack.c.b16 %v2357, %v2356
        %v2562 = vpack.c.b16 %v2359, %v2358
        %v2563 = vpack.c.b16 %v2361, %v2360
        %v2564 = vpack.c.b16 %v2363, %v2362
        %v2565 = vpack.c.b16 %v2365, %v2364
        %v2566 = vpack.c.b16 %v2367, %v2366
        %v2567 = vpack.c.b16 %v2369, %v2368
        %v2568 = vpack.c.b16 %v2371, %v2370
        %v2569 = vpack.c.b16 %v2373, %v2372
        %v2570 = vpack.c.b16 %v2375, %v2374
        %v2571 = vpack.c.b16 %v2377, %v2376
        %v2572 = vpack.c.b16 %v2379, %v2378
        %v2573 = vpack.c.b16 %v2381, %v2380
        %v2574 = vpack.c.b16 %v2383, %v2382
        %v2575 = vpack.c.b16 %v2385, %v2384
        %v2576 = vpack.c.b16 %v2387, %v2386
        %v2577 = vpack.c.b16 %v2389, %v2388
        %v2578 = vpack.c.b16 %v2391, %v2390
        %v2579 = vpack.c.b16 %v2393, %v2392
        %v2580 = vpack.c.b16 %v2395, %v2394
        %v2581 = vpack.c.b16 %v2397, %v2396
        %v2582 = vpack.c.b16 %v2399, %v2398
        %v2583 = vpack.c.b16 %v2401, %v2400
        %v2584 = vpack.c.b16 %v2403, %v2402
        %v2585 = vpack.c.b16 %v2405, %v2404
        %v2586 = vpack.c.b16 %v2407, %v2406
        %v2587 = vpack.c.b16 %v2409, %v2408
        %v2588 = vpack.c.b16 %v2411, %v2410
        %v2589 = vpack.c.b16 %v2413, %v2412
        %v2590 = vpack.c.b16 %v2415, %v2414
        %v2591 = vpack.c.b16 %v2417, %v2416
        %v2592 = vpack.c.b16 %v2419, %v2418
        %v2593 = vpack.c.b16 %v2421, %v2420
        %v2594 = vpack.c.b16 %v2423, %v2422
        %v2595 = vpack.c.b16 %v2425, %v2424
        %v2596 = vpack.c.b16 %v2427, %v2426
        %v2597 = vpack.c.b16 %v2429, %v2428
        %v2598 = vpack.c.b16 %v2431, %v2430
        %v2599 = vpack.c.b16 %v2433, %v2432
        %v2600 = vpack.c.b16 %v2435, %v2434
        %v2601 = vpack.c.b16 %v2437, %v2436
        %v2602 = vpack.c.b16 %v2439, %v2438
        %v2603 = vpack.c.b16 %v2441, %v2440
        %v2604 = vpack.c.b16 %v2443, %v2442
        %v2605 = vpack.c.b16 %v2445, %v2444
        %v2606 = vpack.c.b16 %v2447, %v2446
        %v2607 = vpack.c.b16 %v2449, %v2448
        %v2608 = vpack.c.b16 %v2451, %v2450
        %v2609 = vpack.c.b16 %v2453, %v2452
        %v2610 = vpack.c.b16 %v2455, %v2454
        %v2611 = vpack.c.b16 %v2457, %v2456
        %v2612 = vpack.c.b16 %v2459, %v2458
        %v2613 = vpack.c.b16 %v2461, %v2460
        %v2614 = vpack.c.b16 %v2463, %v2462
        %v2615 = vpack.c.b16 %v2465, %v2464
        %v2616 = vpack.c.b16 %v2467, %v2466
        %v2617 = vpack.c.b16 %v2469, %v2468
        %v2618 = vpack.c.b16 %v2471, %v2470
        %v2619 = vpack.c.b16 %v2473, %v2472
        %v2620 = vpack.c.b16 %v2475, %v2474
        %v2621 = vpack.c.b16 %v2477, %v2476
        %2766 = vmatpush.bf16.msra.mxu0 %v2485
        %2767 = vmatpush.bf16.msra.mxu0 %v2484
        %2768 = vmatpush.bf16.msra.mxu0 %v2483
        %2769 = vmatpush.bf16.msra.mxu0 %v2482
        %2770 = vmatpush.bf16.msra.mxu0 %v2481
        %2771 = vmatpush.bf16.msra.mxu0 %v2480
        %2772 = vmatpush.bf16.msra.mxu0 %v2479
        %2773 = vmatpush.bf16.msra.mxu0 %v2478
        %2774 = vmatmul.bf16.gmra.mxu0 %v1862
        %v2775 = vpop.f32.mrf.mxu0
        %v2776 = vadd.f32 0.0, %v2775
        %v2777 = vpop.f32.mrf.mxu0
        %2778 = vdwg.mxu0
        %2779 = vmatpush.bf16.msra.mxu0 %v2493
        %2780 = vmatpush.bf16.msra.mxu0 %v2492
        %2781 = vmatpush.bf16.msra.mxu0 %v2491
        %2782 = vmatpush.bf16.msra.mxu0 %v2490
        %2783 = vmatpush.bf16.msra.mxu0 %v2489
        %2784 = vmatpush.bf16.msra.mxu0 %v2488
        %2785 = vmatpush.bf16.msra.mxu0 %v2487
        %2786 = vmatpush.bf16.msra.mxu0 %v2486
        %2787 = vmatmul.bf16.gmra.mxu0 %v1863
        %v2788 = vpop.f32.mrf.mxu0
        %v2789 = vadd.f32 %v2776, %v2788
        %v2790 = vpop.f32.mrf.mxu0
        %2791 = vdwg.mxu0
        %2792 = vmatpush.bf16.msra.mxu0 %v2501
        %2793 = vmatpush.bf16.msra.mxu0 %v2500
        %2794 = vmatpush.bf16.msra.mxu0 %v2499
        %2795 = vmatpush.bf16.msra.mxu0 %v2498
        %2796 = vmatpush.bf16.msra.mxu0 %v2497
        %2797 = vmatpush.bf16.msra.mxu0 %v2496
        %2798 = vmatpush.bf16.msra.mxu0 %v2495
        %2799 = vmatpush.bf16.msra.mxu0 %v2494
        %2800 = vmatmul.bf16.gmra.mxu0 %v1864
        %v2801 = vpop.f32.mrf.mxu0
        %v2802 = vadd.f32 %v2789, %v2801
        %v2803 = vpop.f32.mrf.mxu0
        %2804 = vdwg.mxu0
        %2805 = vmatpush.bf16.msra.mxu0 %v2509
        %2806 = vmatpush.bf16.msra.mxu0 %v2508
        %2807 = vmatpush.bf16.msra.mxu0 %v2507
        %2808 = vmatpush.bf16.msra.mxu0 %v2506
        %2809 = vmatpush.bf16.msra.mxu0 %v2505
        %2810 = vmatpush.bf16.msra.mxu0 %v2504
        %2811 = vmatpush.bf16.msra.mxu0 %v2503
        %2812 = vmatpush.bf16.msra.mxu0 %v2502
        %2813 = vmatmul.bf16.gmra.mxu0 %v1865
        %v2814 = vpop.f32.mrf.mxu0
        %v2815 = vadd.f32 %v2802, %v2814
        %v2816 = vpop.f32.mrf.mxu0
        %2817 = vdwg.mxu0
        %2818 = vmatpush.bf16.msra.mxu0 %v2517
        %2819 = vmatpush.bf16.msra.mxu0 %v2516
        %2820 = vmatpush.bf16.msra.mxu0 %v2515
        %2821 = vmatpush.bf16.msra.mxu0 %v2514
        %2822 = vmatpush.bf16.msra.mxu0 %v2513
        %2823 = vmatpush.bf16.msra.mxu0 %v2512
        %2824 = vmatpush.bf16.msra.mxu0 %v2511
        %2825 = vmatpush.bf16.msra.mxu0 %v2510
        %2826 = vmatmul.bf16.gmra.mxu0 %v1866
        %v2827 = vpop.f32.mrf.mxu0
        %v2828 = vadd.f32 %v2815, %v2827
        %v2829 = vpop.f32.mrf.mxu0
        %2830 = vdwg.mxu0
        %2831 = vmatpush.bf16.msra.mxu0 %v2525
        %2832 = vmatpush.bf16.msra.mxu0 %v2524
        %2833 = vmatpush.bf16.msra.mxu0 %v2523
        %2834 = vmatpush.bf16.msra.mxu0 %v2522
        %2835 = vmatpush.bf16.msra.mxu0 %v2521
        %2836 = vmatpush.bf16.msra.mxu0 %v2520
        %2837 = vmatpush.bf16.msra.mxu0 %v2519
        %2838 = vmatpush.bf16.msra.mxu0 %v2518
        %2839 = vmatmul.bf16.gmra.mxu0 %v1867
        %v2840 = vpop.f32.mrf.mxu0
        %v2841 = vadd.f32 %v2828, %v2840
        %v2842 = vpop.f32.mrf.mxu0
        %2843 = vdwg.mxu0
        %2844 = vmatpush.bf16.msra.mxu0 %v2533
        %2845 = vmatpush.bf16.msra.mxu0 %v2532
        %2846 = vmatpush.bf16.msra.mxu0 %v2531
        %2847 = vmatpush.bf16.msra.mxu0 %v2530
        %2848 = vmatpush.bf16.msra.mxu0 %v2529
        %2849 = vmatpush.bf16.msra.mxu0 %v2528
        %2850 = vmatpush.bf16.msra.mxu0 %v2527
        %2851 = vmatpush.bf16.msra.mxu0 %v2526
        %2852 = vmatmul.bf16.gmra.mxu0 %v1868
        %v2853 = vpop.f32.mrf.mxu0
        %v2854 = vadd.f32 %v2841, %v2853
        %v2855 = vpop.f32.mrf.mxu0
        %2856 = vdwg.mxu0
        %2857 = vmatpush.bf16.msra.mxu0 %v2541
        %2858 = vmatpush.bf16.msra.mxu0 %v2540
        %2859 = vmatpush.bf16.msra.mxu0 %v2539
        %2860 = vmatpush.bf16.msra.mxu0 %v2538
        %2861 = vmatpush.bf16.msra.mxu0 %v2537
        %2862 = vmatpush.bf16.msra.mxu0 %v2536
        %2863 = vmatpush.bf16.msra.mxu0 %v2535
        %2864 = vmatpush.bf16.msra.mxu0 %v2534
        %2865 = vmatmul.bf16.gmra.mxu0 %v1869
        %v2866 = vpop.f32.mrf.mxu0
        %v2867 = vadd.f32 %v2854, %v2866
        %v2868 = vpop.f32.mrf.mxu0
        %2869 = vdwg.mxu0
        %2870 = vmatpush.bf16.msra.mxu0 %v2549
        %2871 = vmatpush.bf16.msra.mxu0 %v2548
        %2872 = vmatpush.bf16.msra.mxu0 %v2547
        %2873 = vmatpush.bf16.msra.mxu0 %v2546
        %2874 = vmatpush.bf16.msra.mxu0 %v2545
        %2875 = vmatpush.bf16.msra.mxu0 %v2544
        %2876 = vmatpush.bf16.msra.mxu0 %v2543
        %2877 = vmatpush.bf16.msra.mxu0 %v2542
        %2878 = vmatmul.bf16.gmra.mxu0 %v1872
        %v2879 = vpop.f32.mrf.mxu0
        %v2880 = vadd.f32 %v2867, %v2879
        %v2881 = vpop.f32.mrf.mxu0
        %2882 = vdwg.mxu0
        %2883 = vmatpush.bf16.msra.mxu0 %v2557
        %2884 = vmatpush.bf16.msra.mxu0 %v2556
        %2885 = vmatpush.bf16.msra.mxu0 %v2555
        %2886 = vmatpush.bf16.msra.mxu0 %v2554
        %2887 = vmatpush.bf16.msra.mxu0 %v2553
        %2888 = vmatpush.bf16.msra.mxu0 %v2552
        %2889 = vmatpush.bf16.msra.mxu0 %v2551
        %2890 = vmatpush.bf16.msra.mxu0 %v2550
        %2891 = vmatmul.bf16.gmra.mxu0 %v1873
        %v2892 = vpop.f32.mrf.mxu0
        %v2893 = vadd.f32 %v2880, %v2892
        %v2894 = vpop.f32.mrf.mxu0
        %2895 = vdwg.mxu0
        %2896 = vmatpush.bf16.msra.mxu0 %v2565
        %2897 = vmatpush.bf16.msra.mxu0 %v2564
        %2898 = vmatpush.bf16.msra.mxu0 %v2563
        %2899 = vmatpush.bf16.msra.mxu0 %v2562
        %2900 = vmatpush.bf16.msra.mxu0 %v2561
        %2901 = vmatpush.bf16.msra.mxu0 %v2560
        %2902 = vmatpush.bf16.msra.mxu0 %v2559
        %2903 = vmatpush.bf16.msra.mxu0 %v2558
        %2904 = vmatmul.bf16.gmra.mxu0 %v1874
        %v2905 = vpop.f32.mrf.mxu0
        %v2906 = vadd.f32 %v2893, %v2905
        %v2907 = vpop.f32.mrf.mxu0
        %2908 = vdwg.mxu0
        %2909 = vmatpush.bf16.msra.mxu0 %v2573
        %2910 = vmatpush.bf16.msra.mxu0 %v2572
        %2911 = vmatpush.bf16.msra.mxu0 %v2571
        %2912 = vmatpush.bf16.msra.mxu0 %v2570
        %2913 = vmatpush.bf16.msra.mxu0 %v2569
        %2914 = vmatpush.bf16.msra.mxu0 %v2568
        %2915 = vmatpush.bf16.msra.mxu0 %v2567
        %2916 = vmatpush.bf16.msra.mxu0 %v2566
        %2917 = vmatmul.bf16.gmra.mxu0 %v1875
        %v2918 = vpop.f32.mrf.mxu0
        %v2919 = vadd.f32 %v2906, %v2918
        %v2920 = vpop.f32.mrf.mxu0
        %2921 = vdwg.mxu0
        %2922 = vmatpush.bf16.msra.mxu0 %v2581
        %2923 = vmatpush.bf16.msra.mxu0 %v2580
        %2924 = vmatpush.bf16.msra.mxu0 %v2579
        %2925 = vmatpush.bf16.msra.mxu0 %v2578
        %2926 = vmatpush.bf16.msra.mxu0 %v2577
        %2927 = vmatpush.bf16.msra.mxu0 %v2576
        %2928 = vmatpush.bf16.msra.mxu0 %v2575
        %2929 = vmatpush.bf16.msra.mxu0 %v2574
        %2930 = vmatmul.bf16.gmra.mxu0 %v1876
        %v2931 = vpop.f32.mrf.mxu0
        %v2932 = vadd.f32 %v2919, %v2931
        %v2933 = vpop.f32.mrf.mxu0
        %2934 = vdwg.mxu0
        %2935 = vmatpush.bf16.msra.mxu0 %v2589
        %2936 = vmatpush.bf16.msra.mxu0 %v2588
        %2937 = vmatpush.bf16.msra.mxu0 %v2587
        %2938 = vmatpush.bf16.msra.mxu0 %v2586
        %2939 = vmatpush.bf16.msra.mxu0 %v2585
        %2940 = vmatpush.bf16.msra.mxu0 %v2584
        %2941 = vmatpush.bf16.msra.mxu0 %v2583
        %2942 = vmatpush.bf16.msra.mxu0 %v2582
        %2943 = vmatmul.bf16.gmra.mxu0 %v1877
        %v2944 = vpop.f32.mrf.mxu0
        %v2945 = vadd.f32 %v2932, %v2944
        %v2946 = vpop.f32.mrf.mxu0
        %2947 = vdwg.mxu0
        %2948 = vmatpush.bf16.msra.mxu0 %v2597
        %2949 = vmatpush.bf16.msra.mxu0 %v2596
        %2950 = vmatpush.bf16.msra.mxu0 %v2595
        %2951 = vmatpush.bf16.msra.mxu0 %v2594
        %2952 = vmatpush.bf16.msra.mxu0 %v2593
        %2953 = vmatpush.bf16.msra.mxu0 %v2592
        %2954 = vmatpush.bf16.msra.mxu0 %v2591
        %2955 = vmatpush.bf16.msra.mxu0 %v2590
        %2956 = vmatmul.bf16.gmra.mxu0 %v1878
        %v2957 = vpop.f32.mrf.mxu0
        %v2958 = vadd.f32 %v2945, %v2957
        %v2959 = vpop.f32.mrf.mxu0
        %2960 = vdwg.mxu0
        %2961 = vmatpush.bf16.msra.mxu0 %v2605
        %2962 = vmatpush.bf16.msra.mxu0 %v2604
        %2963 = vmatpush.bf16.msra.mxu0 %v2603
        %2964 = vmatpush.bf16.msra.mxu0 %v2602
        %2965 = vmatpush.bf16.msra.mxu0 %v2601
        %2966 = vmatpush.bf16.msra.mxu0 %v2600
        %2967 = vmatpush.bf16.msra.mxu0 %v2599
        %2968 = vmatpush.bf16.msra.mxu0 %v2598
        %2969 = vmatmul.bf16.gmra.mxu0 %v1879
        %v2970 = vpop.f32.mrf.mxu0
        %v2971 = vadd.f32 %v2958, %v2970
        %v2972 = vpop.f32.mrf.mxu0
        %2973 = vdwg.mxu0
        %2974 = vmatpush.bf16.msra.mxu0 %v2613
        %2975 = vmatpush.bf16.msra.mxu0 %v2612
        %2976 = vmatpush.bf16.msra.mxu0 %v2611
        %2977 = vmatpush.bf16.msra.mxu0 %v2610
        %2978 = vmatpush.bf16.msra.mxu0 %v2609
        %2979 = vmatpush.bf16.msra.mxu0 %v2608
        %2980 = vmatpush.bf16.msra.mxu0 %v2607
        %2981 = vmatpush.bf16.msra.mxu0 %v2606
        %2982 = vmatmul.bf16.gmra.mxu0 %v1882
        %v2983 = vpop.f32.mrf.mxu0
        %v2984 = vadd.f32 %v2971, %v2983
        %v2985 = vpop.f32.mrf.mxu0
        %2986 = vdwg.mxu0
        %2987 = vmatpush.bf16.msra.mxu0 %v2621
        %2988 = vmatpush.bf16.msra.mxu0 %v2620
        %2989 = vmatpush.bf16.msra.mxu0 %v2619
        %2990 = vmatpush.bf16.msra.mxu0 %v2618
        %2991 = vmatpush.bf16.msra.mxu0 %v2617
        %2992 = vmatpush.bf16.msra.mxu0 %v2616
        %2993 = vmatpush.bf16.msra.mxu0 %v2615
        %2994 = vmatpush.bf16.msra.mxu0 %v2614
        %2995 = vmatmul.bf16.gmra.mxu0 %v1883
        %v2996 = vpop.f32.mrf.mxu0
        %v2997 = vadd.f32 %v2984, %v2996
        %v2998 = vpop.f32.mrf.mxu0
        %2999 = vdwg.mxu0
        %v3000 = vadd.f32 %v1568, %v2997
        %v3001 = vmul.f32 %v3000, 0.0069444445
        %v3002 = vld [vmem:[%s5] sm:$0x1]
        %v3003 = vadd.f32 %v3001, %v3002
        %3004 = vst [vmem:[%s256] sm:$0x1] %v3003
        %s3005 = sand.u32 %s164, 1
        %s3006 = scalar_lea.sflag [#allocation3], %s3005
        %s3007 = sand.u32 %s164, 1
        %s3008 = scalar_lea.vmem [#allocation2], %s3007
        // Predicated region
        $region45: #{model_forward.1} parent=43 // pred_check
          %p3009 = pneg %p174
        $region46: #{model_forward.1} parent=43 // pred_check_branch
          %3011 = sbr.rel (%p3009) target = $region48
        $region47: #{model_forward.1} parent=43 // pred_region
          %3013 = vsyncadd %s3006, 0
          %s3014 = scalar_lea.hbm %s6, %s20
          %s3016 = sshll.u32 %s3008, 4
          %s3017 = int_to_ptr.vmem [resolvable:$true] %s3016
          %s3018 = sshll.u32 %s3014, 4
          %s3019 = int_to_ptr.hbm [resolvable:$true] %s3018
          %3021 = dma.vmem_to_hbm [thread:$0]  %s3017, 16, %s3019, %s3006
        $region48: #{model_forward.1} parent=43 // pred_fallthru
          _
      $region44: #{model_forward.1} parent=5 // pred_fallthru
        _
      %p3022 = scmp.le.s32.totalorder 2, %s15
      // Predicated region
      $region49: #{model_forward.1} parent=5 // pred_check
        %p3023 = pneg %p3022
      $region50: #{model_forward.1} parent=5 // pred_check_branch
        %3025 = sbr.rel (%p3023) target = $region52
      $region51: #{model_forward.1} parent=5 // pred_region
        %s3026 = ssub.s32 %s15, 2
        // Predicated region
        $region53: #{model_forward.1} parent=51 // pred_check
          %p3027 = pneg %p180
        $region54: #{model_forward.1} parent=51 // pred_check_branch
          %3029 = sbr.rel (%p3027) target = $region56
        $region55: #{model_forward.1} parent=51 // pred_region
          %s3030 = sand.u32 %s165, 1
          %s3031 = scalar_lea.sflag [#allocation3], %s3030
          %s3032 = sand.u32 %s165, 1
          %s3033 = scalar_lea.vmem [#allocation2], %s3032
          %3035 = dma.done %s3031, 16
        $region56: #{model_forward.1} parent=51 // pred_fallthru
          _
      $region52: #{model_forward.1} parent=5 // pred_fallthru
        _
    $region6: #{model_forward.1} parent=1 // loop_footer
      %s19 = sadd.s32 1, %s15
    $region7: #{model_forward.1} parent=1 // loop_footer_branch
      %14 = sbr.rel target = $region3
    $region8: #{model_forward.1} parent=1 // loop_exit
      _
    %3036 = vsyncpa [#allocation3], 1
    %s3037 = scalar_lea.sflag [#allocation3], 1
    %3038 = vsyncpa %s3037, 1

</llo_original>
